<compile_context>
chip_gen: v7x
topology: tpu7x:2x2x1
jax: 0.10.0
libtpu: 0.0.40
codegen_flags: <defaults>
</compile_context>

<pallas_src>
import functools

import jax
import jax.numpy as jnp
from jax.experimental import pallas as pl
from jax.experimental.pallas import tpu as pltpu


def _bn_relu_kernel(x_ref, gb_ref, o_ref, *, eps):
    # x_ref:  (N, tc, HW)  one channel tile, full reduction extent (N and H*W)
    # gb_ref: (tc, 2)      column 0 = gamma, column 1 = beta (f32)
    x = x_ref[...].astype(jnp.float32)
    inv_n = 1.0 / float(x.shape[0] * x.shape[2])

    # Batch mean over (N, HW): lane reduce, then batch reduce.
    mean = jnp.sum(jnp.sum(x, axis=2, keepdims=True), axis=0, keepdims=True) * inv_n
    xc = x - mean                                                    # centered
    var = jnp.sum(jnp.sum(xc * xc, axis=2, keepdims=True),
                  axis=0, keepdims=True) * inv_n                     # biased variance
    inv_std = jax.lax.rsqrt(var + eps)                               # (1, tc, 1)

    gb = gb_ref[...]                                                 # (tc, 2)
    tc = gb.shape[0]
    gamma = gb[:, 0:1].reshape(1, tc, 1)                             # static lane slice
    beta = gb[:, 1:2].reshape(1, tc, 1)

    y = xc * (inv_std * gamma) + beta
    o_ref[...] = jnp.maximum(y, 0.0).astype(o_ref.dtype)


def _pick_channel_tile(N, C, HW, itemsize):
    """Largest sublane-aligned channel tile with modest blocks and grid >= 2."""
    per_channel = N * HW * itemsize
    target = 512 * 1024  # per-block budget: 2x-buffered in + out plus f32 temps
                         # stay far below v7x's 32 MiB scoped-VMEM default; and
                         # >=2 grid steps let write-back pipeline behind the next
                         # read and let v7x's two TensorCores split the work.
    if C % 8 != 0:
        # TODO(synk): add a padded/masked channel-tile path for C not a multiple
        # of 8 combined with huge N*H*W (full-C block could exceed VMEM).
        return C
    cands = [d for d in range(8, C + 1, 8) if C % d == 0]
    tc = cands[0]
    for d in cands:
        if d * per_channel <= target and (C // d) >= 2:
            tc = d
    # TODO(synk): if even an 8-channel block exceeds VMEM (huge N*H*W), split the
    # spatial axis onto a second 'arbitrary' grid axis and accumulate sum/sumsq
    # in VMEM scratch before a normalize pass (also fixes the 196->256 lane pad).
    return tc


def batchnorm_relu(x_nchw, gamma, beta, *, eps=1e-5):
    """x_nchw: (N, C, H, W); gamma/beta: (C,). Returns (N, C, H, W)."""
    N, C, H, W = x_nchw.shape
    HW = H * W

    x3 = x_nchw.reshape(N, C, HW)                                  # free view
    gb = jnp.stack([gamma.astype(jnp.float32),
                    beta.astype(jnp.float32)], axis=1)             # (C, 2)

    itemsize = jnp.dtype(x_nchw.dtype).itemsize
    tc = _pick_channel_tile(N, C, HW, itemsize)
    grid = (pl.cdiv(C, tc),)

    out3 = pl.pallas_call(
        functools.partial(_bn_relu_kernel, eps=eps),
        out_shape=jax.ShapeDtypeStruct((N, C, HW), x_nchw.dtype),
        grid_spec=pltpu.PrefetchScalarGridSpec(
            num_scalar_prefetch=0,
            grid=grid,
            in_specs=[
                pl.BlockSpec((N, tc, HW), lambda i: (0, i, 0)),    # activations
                pl.BlockSpec((tc, 2), lambda i: (i, 0)),           # gamma|beta tile
            ],
            out_specs=pl.BlockSpec((N, tc, HW), lambda i: (0, i, 0)),
        ),
        compiler_params=pltpu.CompilerParams(
            dimension_semantics=("parallel",)),
    )(x3, gb)

    return out3.reshape(N, C, H, W)                                # free view back


def _reference(x_nchw, gamma, beta, eps=1e-5):
    x = x_nchw.astype(jnp.float32)
    mean = jnp.mean(x, axis=(0, 2, 3), keepdims=True)
    var = jnp.mean((x - mean) ** 2, axis=(0, 2, 3), keepdims=True)
    y = (x - mean) * jax.lax.rsqrt(var + eps)
    y = y * gamma.reshape(1, -1, 1, 1) + beta.reshape(1, -1, 1, 1)
    return jnp.maximum(y, 0.0).astype(x_nchw.dtype)


if __name__ == "__main__":
    key = jax.random.PRNGKey(0)
    kx, kg, kb = jax.random.split(key, 3)

    # Shape from the module's forward: x412 = torch.randn(1, 888, 14, 14).
    N, C, H, W = 1, 888, 14, 14
    x = jax.random.normal(kx, (N, C, H, W), dtype=jnp.float32)

    # BatchNorm2d affine parameters (shape (C,)), deterministic init.
    gamma = 1.0 + 0.1 * jax.random.normal(kg, (C,), dtype=jnp.float32)
    beta = 0.1 * jax.random.normal(kb, (C,), dtype=jnp.float32)

    fn = jax.jit(lambda xx, gg, bb: batchnorm_relu(xx, gg, bb, eps=1e-5))
    out = jax.block_until_ready(fn(x, gamma, beta))

    ref = _reference(x, gamma, beta, eps=1e-5)
    assert out.shape == (N, C, H, W)
    assert out.dtype == x.dtype
    assert jnp.allclose(out, ref, atol=1e-4, rtol=1e-4), "mismatch vs reference"

    print("KERNEL_OK")
</pallas_src>

<mosaic_0001>
module attributes {stable_mosaic.version = 11 : i64} {
  func.func @_bn_relu_kernel(%arg0: i32, %arg1: memref<1x296x196xf32, #tpu.memory_space<vmem>>, %arg2: memref<296x2xf32, #tpu.memory_space<vmem>>, %arg3: memref<1x296x196xf32, #tpu.memory_space<vmem>>) attributes {dimension_semantics = [#tpu.dimension_semantics<parallel>], iteration_bounds = array<i64: 3>, scalar_prefetch = 0 : i64, scratch_operands = 0 : i64, tpu.core_type = #tpu.core_type<tc>, window_params = [{transform_indices = @transform_0, window_bounds = array<i64: 1, 296, 196>}, {transform_indices = @transform_1, window_bounds = array<i64: 296, 2>}, {transform_indices = @transform_2, window_bounds = array<i64: 1, 296, 196>}]} {
    %c0 = arith.constant 0 : index
    %c0_0 = arith.constant 0 : index
    %c0_1 = arith.constant 0 : index
    %0 = vector.load %arg1[%c0, %c0_0, %c0_1] : memref<1x296x196xf32, #tpu.memory_space<vmem>>, vector<1x296x196xf32>
    %cst = arith.constant dense<0.000000e+00> : vector<1x296xf32>
    %1 = vector.multi_reduction <add>, %0, %cst [2] : vector<1x296x196xf32> to vector<1x296xf32>
    %2 = vector.shape_cast %1 : vector<1x296xf32> to vector<1x296x1xf32>
    %cst_2 = arith.constant dense<0.000000e+00> : vector<296x1xf32>
    %3 = vector.multi_reduction <add>, %2, %cst_2 [0] : vector<1x296x1xf32> to vector<296x1xf32>
    %4 = vector.shape_cast %3 : vector<296x1xf32> to vector<1x296x1xf32>
    %cst_3 = arith.constant 0.00510204071 : f32
    %5 = vector.broadcast %cst_3 : f32 to vector<1x296x1xf32>
    %6 = arith.mulf %4, %5 : vector<1x296x1xf32>
    %7 = vector.broadcast %6 : vector<1x296x1xf32> to vector<1x296x196xf32>
    %8 = arith.subf %0, %7 : vector<1x296x196xf32>
    %9 = arith.mulf %8, %8 : vector<1x296x196xf32>
    %cst_4 = arith.constant dense<0.000000e+00> : vector<1x296xf32>
    %10 = vector.multi_reduction <add>, %9, %cst_4 [2] : vector<1x296x196xf32> to vector<1x296xf32>
    %11 = vector.shape_cast %10 : vector<1x296xf32> to vector<1x296x1xf32>
    %cst_5 = arith.constant dense<0.000000e+00> : vector<296x1xf32>
    %12 = vector.multi_reduction <add>, %11, %cst_5 [0] : vector<1x296x1xf32> to vector<296x1xf32>
    %13 = vector.shape_cast %12 : vector<296x1xf32> to vector<1x296x1xf32>
    %cst_6 = arith.constant 0.00510204071 : f32
    %14 = vector.broadcast %cst_6 : f32 to vector<1x296x1xf32>
    %15 = arith.mulf %13, %14 : vector<1x296x1xf32>
    %cst_7 = arith.constant 9.99999974E-6 : f32
    %16 = vector.broadcast %cst_7 : f32 to vector<1x296x1xf32>
    %17 = arith.addf %15, %16 : vector<1x296x1xf32>
    %18 = math.rsqrt %17 : vector<1x296x1xf32>
    %c0_8 = arith.constant 0 : index
    %c0_9 = arith.constant 0 : index
    %19 = vector.load %arg2[%c0_8, %c0_9] : memref<296x2xf32, #tpu.memory_space<vmem>>, vector<296x2xf32>
    %20 = vector.extract_strided_slice %19 {offsets = [0, 0], sizes = [296, 1], strides = [1, 1]} : vector<296x2xf32> to vector<296x1xf32>
    %21 = vector.shape_cast %20 : vector<296x1xf32> to vector<1x296x1xf32>
    %22 = vector.extract_strided_slice %19 {offsets = [0, 1], sizes = [296, 1], strides = [1, 1]} : vector<296x2xf32> to vector<296x1xf32>
    %23 = vector.shape_cast %22 : vector<296x1xf32> to vector<1x296x1xf32>
    %24 = arith.mulf %18, %21 : vector<1x296x1xf32>
    %25 = vector.broadcast %24 : vector<1x296x1xf32> to vector<1x296x196xf32>
    %26 = arith.mulf %8, %25 : vector<1x296x196xf32>
    %27 = vector.broadcast %23 : vector<1x296x1xf32> to vector<1x296x196xf32>
    %28 = arith.addf %26, %27 : vector<1x296x196xf32>
    %cst_10 = arith.constant 0.000000e+00 : f32
    %29 = vector.broadcast %cst_10 : f32 to vector<1x296x196xf32>
    %30 = arith.maximumf %28, %29 : vector<1x296x196xf32>
    %c0_11 = arith.constant 0 : index
    %c0_12 = arith.constant 0 : index
    %c0_13 = arith.constant 0 : index
    %31 = vector.load %arg3[%c0_11, %c0_12, %c0_13] : memref<1x296x196xf32, #tpu.memory_space<vmem>>, vector<1x296x196xf32>
    tpu.vector_store %arg3[%c0_11, %c0_12, %c0_13], %30 {strides = array<i32>} : memref<1x296x196xf32, #tpu.memory_space<vmem>>, vector<1x296x196xf32>,
    return
  }
  func.func @transform_0(%arg0: i32) -> (i32, i32, i32) {
    %c0_i32 = arith.constant 0 : i32
    %c0_i32_0 = arith.constant 0 : i32
    %c0_i32_1 = arith.constant 0 : i32
    return %c0_i32, %arg0, %c0_i32_0 : i32, i32, i32
  }
  func.func @transform_1(%arg0: i32) -> (i32, i32) {
    %c0_i32 = arith.constant 0 : i32
    %c0_i32_0 = arith.constant 0 : i32
    return %arg0, %c0_i32 : i32, i32
  }
  func.func @transform_2(%arg0: i32) -> (i32, i32, i32) {
    %c0_i32 = arith.constant 0 : i32
    %c0_i32_0 = arith.constant 0 : i32
    %c0_i32_1 = arith.constant 0 : i32
    return %c0_i32, %arg0, %c0_i32_0 : i32, i32, i32
  }
}

</mosaic_0001>

<llo_original>
// kernel: _lambda_.1
$region0: #{_lambda_.1}
  #allocation0 [shape = 'u32[]', space=smem, size = 0x4, offset = 0x4, fixed_abs, tag = 'smem constant byte address 0x4 - core index']
  #allocation1 [shape = 'u32[144,128]{1,0:T(1,128)}', space=vmem, size = 0x12000, scoped, tag = 'internal scratch']
  %s0 = inlined_call_operand.vmem [shape: f32[1,888,196], index: 0, kind: input, shape index: {}]
  %s1 = inlined_call_operand.vmem [shape: f32[888,2], index: 1, kind: input, shape index: {}]
  %s2 = inlined_call_operand.vmem [shape: f32[1,888,196], index: 2, kind: output, shape index: {}]
  %s3 = sld [smem:[#allocation0]]
  $region41: #{_lambda_.1} parent=0
    _
  %s5 = ssub.s32 1, %s3
  %s6 = scalar_select 0, %s5, %s3
  loop: start=0, step=1, limit=5
  $region2: #{_lambda_.1} parent=0 // loop_pre_header
    _
  $region3: #{_lambda_.1} parent=0 // loop_header
    %s8 = sphi 0, %s12
    %p9 = scmp.ge.s32.totalorder %s8, 5
    %s18 = sphi 0, %s20
    %s21 = sphi 0, %s18
    %s22 = sphi 0, %s21
    %s38 = sphi 0, %s22
    %s44 = sphi 0, %s46
    %s47 = sphi 0, %s44
    %s48 = sphi 0, %s47
    %s64 = sphi 0, %s48
    %s70 = sphi 0, %s72
    %s73 = sphi 0, %s70
    %s74 = sphi 0, %s73
    %s90 = sphi 0, %s74
  $region4: #{_lambda_.1} parent=0 // loop_header_branch
    %11 = sbr.rel (%p9) target = $region8
  $region5: #{_lambda_.1} parent=0 // loop_body
    %s13 = ssub.s32 %s8, 1
    %s14 = ssub.s32 %s8, 2
    %s15 = sadd.s32 %s8, 1
    %s16 = ssub.s32 %s8, %s15
    %p17 = scmp.eq.s32.totalorder %s16, 0
    %s19 = sadd.s32 %s18, 1
    %s20 = scalar_select %p17, %s18, %s19
    %p23 = pneg %p17
    %p24 = scmp.eq.s32.totalorder %s8, 2
    %p25 = por %p23, %p24
    %p26 = scmp.ne.s32.totalorder %s18, %s21
    %p27 = scmp.eq.s32.totalorder %s8, 0
    %p28 = por %p26, %p27
    %p29 = scmp.ne.s32.totalorder %s18, %s21
    %p30 = scmp.eq.s32.totalorder %s13, 2
    %p31 = por %p29, %p30
    %p32 = scmp.ne.s32.totalorder %s21, %s22
    %p33 = scmp.eq.s32.totalorder %s13, 0
    %p34 = por %p32, %p33
    %p35 = scmp.ne.s32.totalorder %s21, %s22
    %p36 = scmp.eq.s32.totalorder %s14, 2
    %p37 = por %p35, %p36
    %p39 = scmp.ne.s32.totalorder %s22, %s38
    %p40 = scmp.eq.s32.totalorder %s14, 0
    %p41 = por %p39, %p40
    %s42 = ssub.s32 %s8, %s15
    %p43 = scmp.eq.s32.totalorder %s42, 0
    %s45 = sadd.s32 %s44, 1
    %s46 = scalar_select %p43, %s44, %s45
    %p49 = pneg %p43
    %p50 = scmp.eq.s32.totalorder %s8, 2
    %p51 = por %p49, %p50
    %p52 = scmp.ne.s32.totalorder %s44, %s47
    %p53 = scmp.eq.s32.totalorder %s8, 0
    %p54 = por %p52, %p53
    %p55 = scmp.ne.s32.totalorder %s44, %s47
    %p56 = scmp.eq.s32.totalorder %s13, 2
    %p57 = por %p55, %p56
    %p58 = scmp.ne.s32.totalorder %s47, %s48
    %p59 = scmp.eq.s32.totalorder %s13, 0
    %p60 = por %p58, %p59
    %p61 = scmp.ne.s32.totalorder %s47, %s48
    %p62 = scmp.eq.s32.totalorder %s14, 2
    %p63 = por %p61, %p62
    %p65 = scmp.ne.s32.totalorder %s48, %s64
    %p66 = scmp.eq.s32.totalorder %s14, 0
    %p67 = por %p65, %p66
    %s68 = ssub.s32 %s8, %s15
    %p69 = scmp.eq.s32.totalorder %s68, 0
    %s71 = sadd.s32 %s70, 1
    %s72 = scalar_select %p69, %s70, %s71
    %p75 = pneg %p69
    %p76 = scmp.eq.s32.totalorder %s8, 2
    %p77 = por %p75, %p76
    %p78 = scmp.ne.s32.totalorder %s70, %s73
    %p79 = scmp.eq.s32.totalorder %s8, 0
    %p80 = por %p78, %p79
    %p81 = scmp.ne.s32.totalorder %s70, %s73
    %p82 = scmp.eq.s32.totalorder %s13, 2
    %p83 = por %p81, %p82
    %p84 = scmp.ne.s32.totalorder %s73, %s74
    %p85 = scmp.eq.s32.totalorder %s13, 0
    %p86 = por %p84, %p85
    %p87 = scmp.ne.s32.totalorder %s73, %s74
    %p88 = scmp.eq.s32.totalorder %s14, 2
    %p89 = por %p87, %p88
    %p91 = scmp.ne.s32.totalorder %s74, %s90
    %p92 = scmp.eq.s32.totalorder %s14, 0
    %p93 = por %p91, %p92
    %p94 = scmp.le.s32.totalorder 1, %s8
    %p95 = scmp.lt.s32.totalorder %s8, 4
    %p96 = pnand %p94, %p95
    %p97 = pneg %p96
    // Predicated region
    $region9: #{_lambda_.1} parent=5 // pred_check
      _
    $region10: #{_lambda_.1} parent=5 // pred_check_branch
      %99 = sbr.rel (%p96) target = $region12
    $region11: #{_lambda_.1} parent=5 // pred_region
      %s100 = ssub.s32 %s8, 1
    $region12: #{_lambda_.1} parent=5 // pred_fallthru
      _
    %p101 = scmp.lt.s32.totalorder %s8, 3
    // Predicated region
    $region13: #{_lambda_.1} parent=5 // pred_check
      %p102 = pneg %p101
    $region14: #{_lambda_.1} parent=5 // pred_check_branch
      %104 = sbr.rel (%p102) target = $region16
    $region15: #{_lambda_.1} parent=5 // pred_region
      // Predicated region
      $region17: #{_lambda_.1} parent=15 // pred_check
        %p105 = pneg %p28
      $region18: #{_lambda_.1} parent=15 // pred_check_branch
        %107 = sbr.rel (%p105) target = $region20
      $region19: #{_lambda_.1} parent=15 // pred_region
        %s108 = smul.u32 37, %s8
        %p109 = scmp.lt.s32.totalorder %s108, 110
        %s110 = scalar_select %p109, %s108, 110
        %s111 = smul.addr %s110, 2
        %s112 = smul.addr %s111, 8
        %s113 = scalar_lea.vmem %s0, %s112
        %s114 = smul.u32 37, %s8
      $region20: #{_lambda_.1} parent=15 // pred_fallthru
        _
      // Predicated region
      $region21: #{_lambda_.1} parent=15 // pred_check
        %p115 = pneg %p54
      $region22: #{_lambda_.1} parent=15 // pred_check_branch
        %117 = sbr.rel (%p115) target = $region24
      $region23: #{_lambda_.1} parent=15 // pred_region
        %s118 = smul.u32 37, %s8
        %p119 = scmp.lt.s32.totalorder %s118, 110
        %s120 = scalar_select %p119, %s118, 110
        %s121 = smul.addr %s120, 8
        %s122 = scalar_lea.vmem %s1, %s121
        %s123 = smul.u32 37, %s8
      $region24: #{_lambda_.1} parent=15 // pred_fallthru
        _
    $region16: #{_lambda_.1} parent=5 // pred_fallthru
      _
    %p124 = scmp.le.s32.totalorder 1, %s8
    %p125 = scmp.lt.s32.totalorder %s8, 4
    %p126 = pnand %p124, %p125
    %p127 = pneg %p126
    // Predicated region
    $region25: #{_lambda_.1} parent=5 // pred_check
      _
    $region26: #{_lambda_.1} parent=5 // pred_check_branch
      %129 = sbr.rel (%p126) target = $region28
    $region27: #{_lambda_.1} parent=5 // pred_region
      %s130 = ssub.s32 %s8, 1
      %s131 = smul.u32 37, %s13
      %p132 = scmp.lt.s32.totalorder %s131, 110
      %s133 = scalar_select %p132, %s131, 110
      %s134 = smul.addr %s133, 2
      %s135 = smul.addr %s134, 8
      %s136 = scalar_lea.vmem %s0, %s135
      %p137 = pneg %p34
      %p138 = pneg %p31
      %s139 = smul.u32 37, %s13
      %p140 = scmp.lt.s32.totalorder %s139, 110
      %s141 = scalar_select %p140, %s139, 110
      %s142 = smul.addr %s141, 8
      %s143 = scalar_lea.vmem %s1, %s142
      %p144 = pneg %p60
      %p145 = pneg %p57
      %p146 = pneg %p86
      %p147 = pneg %p83
      %s148 = smul.u32 37, %s13
      %p149 = scmp.lt.s32.totalorder %s148, 110
      %s150 = scalar_select %p149, %s148, 110
      %s151 = smul.addr %s150, 2
      %s152 = smul.addr %s151, 8
      %s153 = scalar_lea.vmem %s2, %s152
      %s154 = smul.u32 37, %s13
      %p155 = scmp.lt.s32.totalorder %s154, 110
      %s156 = scalar_select %p155, %s154, 110
      %s157 = smul.addr %s156, 2
      %s158 = smul.addr %s157, 8
      %s159 = scalar_lea.vmem %s0, %s158
      %s160 = smul.u32 37, %s13
      %s161 = smul.u32 37, %s13
      %p162 = scmp.lt.s32.totalorder %s161, 110
      %s163 = scalar_select %p162, %s161, 110
      %s164 = smul.addr %s163, 8
      %s165 = scalar_lea.vmem %s1, %s164
      %s166 = smul.u32 37, %s13
      %s167 = smul.u32 37, %s13
      %p168 = scmp.lt.s32.totalorder %s167, 110
      %s169 = scalar_select %p168, %s167, 110
      %s170 = smul.addr %s169, 2
      %s171 = smul.addr %s170, 8
      %s172 = scalar_lea.vmem %s2, %s171
      %s173 = smul.u32 37, %s13
      %v174 = vld [vmem:[%s159] sm:$0xff]
      %v175 = vld [vmem:[%s159 + $0x8] sm:$0xff]
      %v176 = vld [vmem:[%s159 + $0x10] sm:$0xff]
      %v177 = vld [vmem:[%s159 + $0x18] sm:$0xff]
      %v178 = vld [vmem:[%s159 + $0x20] sm:$0xff]
      %v179 = vld [vmem:[%s159 + $0x28] sm:$0xff]
      %v180 = vld [vmem:[%s159 + $0x30] sm:$0xff]
      %v181 = vld [vmem:[%s159 + $0x38] sm:$0xff]
      %v182 = vld [vmem:[%s159 + $0x40] sm:$0xff]
      %v183 = vld [vmem:[%s159 + $0x48] sm:$0xff]
      %v184 = vld [vmem:[%s159 + $0x50] sm:$0xff]
      %v185 = vld [vmem:[%s159 + $0x58] sm:$0xff]
      %v186 = vld [vmem:[%s159 + $0x60] sm:$0xff]
      %v187 = vld [vmem:[%s159 + $0x68] sm:$0xff]
      %v188 = vld [vmem:[%s159 + $0x70] sm:$0xff]
      %v189 = vld [vmem:[%s159 + $0x78] sm:$0xff]
      %v190 = vld [vmem:[%s159 + $0x80] sm:$0xff]
      %v191 = vld [vmem:[%s159 + $0x88] sm:$0xff]
      %v192 = vld [vmem:[%s159 + $0x90] sm:$0xff]
      %v193 = vld [vmem:[%s159 + $0x98] sm:$0xff]
      %v194 = vld [vmem:[%s159 + $0xa0] sm:$0xff]
      %v195 = vld [vmem:[%s159 + $0xa8] sm:$0xff]
      %v196 = vld [vmem:[%s159 + $0xb0] sm:$0xff]
      %v197 = vld [vmem:[%s159 + $0xb8] sm:$0xff]
      %v198 = vld [vmem:[%s159 + $0xc0] sm:$0xff]
      %v199 = vld [vmem:[%s159 + $0xc8] sm:$0xff]
      %v200 = vld [vmem:[%s159 + $0xd0] sm:$0xff]
      %v201 = vld [vmem:[%s159 + $0xd8] sm:$0xff]
      %v202 = vld [vmem:[%s159 + $0xe0] sm:$0xff]
      %v203 = vld [vmem:[%s159 + $0xe8] sm:$0xff]
      %v204 = vld [vmem:[%s159 + $0xf0] sm:$0xff]
      %v205 = vld [vmem:[%s159 + $0xf8] sm:$0xff]
      %v206 = vld [vmem:[%s159 + $0x100] sm:$0xff]
      %v207 = vld [vmem:[%s159 + $0x108] sm:$0xff]
      %v208 = vld [vmem:[%s159 + $0x110] sm:$0xff]
      %v209 = vld [vmem:[%s159 + $0x118] sm:$0xff]
      %v210 = vld [vmem:[%s159 + $0x120] sm:$0xff]
      %v211 = vld [vmem:[%s159 + $0x128] sm:$0xff]
      %v212 = vld [vmem:[%s159 + $0x130] sm:$0xff]
      %v213 = vld [vmem:[%s159 + $0x138] sm:$0xff]
      %v214 = vld [vmem:[%s159 + $0x140] sm:$0xff]
      %v215 = vld [vmem:[%s159 + $0x148] sm:$0xff]
      %v216 = vld [vmem:[%s159 + $0x150] sm:$0xff]
      %v217 = vld [vmem:[%s159 + $0x158] sm:$0xff]
      %v218 = vld [vmem:[%s159 + $0x160] sm:$0xff]
      %v219 = vld [vmem:[%s159 + $0x168] sm:$0xff]
      %v220 = vld [vmem:[%s159 + $0x170] sm:$0xff]
      %v221 = vld [vmem:[%s159 + $0x178] sm:$0xff]
      %v222 = vld [vmem:[%s159 + $0x180] sm:$0xff]
      %v223 = vld [vmem:[%s159 + $0x188] sm:$0xff]
      %v224 = vld [vmem:[%s159 + $0x190] sm:$0xff]
      %v225 = vld [vmem:[%s159 + $0x198] sm:$0xff]
      %v226 = vld [vmem:[%s159 + $0x1a0] sm:$0xff]
      %v227 = vld [vmem:[%s159 + $0x1a8] sm:$0xff]
      %v228 = vld [vmem:[%s159 + $0x1b0] sm:$0xff]
      %v229 = vld [vmem:[%s159 + $0x1b8] sm:$0xff]
      %v230 = vld [vmem:[%s159 + $0x1c0] sm:$0xff]
      %v231 = vld [vmem:[%s159 + $0x1c8] sm:$0xff]
      %v232 = vld [vmem:[%s159 + $0x1d0] sm:$0xff]
      %v233 = vld [vmem:[%s159 + $0x1d8] sm:$0xff]
      %v234 = vld [vmem:[%s159 + $0x1e0] sm:$0xff]
      %v235 = vld [vmem:[%s159 + $0x1e8] sm:$0xff]
      %v236 = vld [vmem:[%s159 + $0x1f0] sm:$0xff]
      %v237 = vld [vmem:[%s159 + $0x1f8] sm:$0xff]
      %v238 = vld [vmem:[%s159 + $0x200] sm:$0xff]
      %v239 = vld [vmem:[%s159 + $0x208] sm:$0xff]
      %v240 = vld [vmem:[%s159 + $0x210] sm:$0xff]
      %v241 = vld [vmem:[%s159 + $0x218] sm:$0xff]
      %v242 = vld [vmem:[%s159 + $0x220] sm:$0xff]
      %v243 = vld [vmem:[%s159 + $0x228] sm:$0xff]
      %v244 = vld [vmem:[%s159 + $0x230] sm:$0xff]
      %v245 = vld [vmem:[%s159 + $0x238] sm:$0xff]
      %v246 = vld [vmem:[%s159 + $0x240] sm:$0xff]
      %v247 = vld [vmem:[%s159 + $0x248] sm:$0xff]
      %vm248 = vcmask 556032
      %v249 = vsel %vm248, %v175, 0.0
      %v250 = vadd.f32 %v174, %v249
      %251 = vadd.xlane.f32.xlu0 %v250
      %v252 = vpop.xlane.xlu0 %251
      %v253 = vsel %vm248, %v177, 0.0
      %v254 = vadd.f32 %v176, %v253
      %255 = vadd.xlane.f32.xlu0 %v254
      %v256 = vpop.xlane.xlu0 %255
      %v257 = vsel %vm248, %v179, 0.0
      %v258 = vadd.f32 %v178, %v257
      %259 = vadd.xlane.f32.xlu0 %v258
      %v260 = vpop.xlane.xlu0 %259
      %v261 = vsel %vm248, %v181, 0.0
      %v262 = vadd.f32 %v180, %v261
      %263 = vadd.xlane.f32.xlu0 %v262
      %v264 = vpop.xlane.xlu0 %263
      %v265 = vsel %vm248, %v183, 0.0
      %v266 = vadd.f32 %v182, %v265
      %267 = vadd.xlane.f32.xlu0 %v266
      %v268 = vpop.xlane.xlu0 %267
      %v269 = vsel %vm248, %v185, 0.0
      %v270 = vadd.f32 %v184, %v269
      %271 = vadd.xlane.f32.xlu0 %v270
      %v272 = vpop.xlane.xlu0 %271
      %v273 = vsel %vm248, %v187, 0.0
      %v274 = vadd.f32 %v186, %v273
      %275 = vadd.xlane.f32.xlu0 %v274
      %v276 = vpop.xlane.xlu0 %275
      %v277 = vsel %vm248, %v189, 0.0
      %v278 = vadd.f32 %v188, %v277
      %279 = vadd.xlane.f32.xlu0 %v278
      %v280 = vpop.xlane.xlu0 %279
      %v281 = vsel %vm248, %v191, 0.0
      %v282 = vadd.f32 %v190, %v281
      %283 = vadd.xlane.f32.xlu0 %v282
      %v284 = vpop.xlane.xlu0 %283
      %v285 = vsel %vm248, %v193, 0.0
      %v286 = vadd.f32 %v192, %v285
      %287 = vadd.xlane.f32.xlu0 %v286
      %v288 = vpop.xlane.xlu0 %287
      %v289 = vsel %vm248, %v195, 0.0
      %v290 = vadd.f32 %v194, %v289
      %291 = vadd.xlane.f32.xlu0 %v290
      %v292 = vpop.xlane.xlu0 %291
      %v293 = vsel %vm248, %v197, 0.0
      %v294 = vadd.f32 %v196, %v293
      %295 = vadd.xlane.f32.xlu0 %v294
      %v296 = vpop.xlane.xlu0 %295
      %v297 = vsel %vm248, %v199, 0.0
      %v298 = vadd.f32 %v198, %v297
      %299 = vadd.xlane.f32.xlu0 %v298
      %v300 = vpop.xlane.xlu0 %299
      %v301 = vsel %vm248, %v201, 0.0
      %v302 = vadd.f32 %v200, %v301
      %303 = vadd.xlane.f32.xlu0 %v302
      %v304 = vpop.xlane.xlu0 %303
      %v305 = vsel %vm248, %v203, 0.0
      %v306 = vadd.f32 %v202, %v305
      %307 = vadd.xlane.f32.xlu0 %v306
      %v308 = vpop.xlane.xlu0 %307
      %v309 = vsel %vm248, %v205, 0.0
      %v310 = vadd.f32 %v204, %v309
      %311 = vadd.xlane.f32.xlu0 %v310
      %v312 = vpop.xlane.xlu0 %311
      %v313 = vsel %vm248, %v207, 0.0
      %v314 = vadd.f32 %v206, %v313
      %315 = vadd.xlane.f32.xlu0 %v314
      %v316 = vpop.xlane.xlu0 %315
      %v317 = vsel %vm248, %v209, 0.0
      %v318 = vadd.f32 %v208, %v317
      %319 = vadd.xlane.f32.xlu0 %v318
      %v320 = vpop.xlane.xlu0 %319
      %v321 = vsel %vm248, %v211, 0.0
      %v322 = vadd.f32 %v210, %v321
      %323 = vadd.xlane.f32.xlu0 %v322
      %v324 = vpop.xlane.xlu0 %323
      %v325 = vsel %vm248, %v213, 0.0
      %v326 = vadd.f32 %v212, %v325
      %327 = vadd.xlane.f32.xlu0 %v326
      %v328 = vpop.xlane.xlu0 %327
      %v329 = vsel %vm248, %v215, 0.0
      %v330 = vadd.f32 %v214, %v329
      %331 = vadd.xlane.f32.xlu0 %v330
      %v332 = vpop.xlane.xlu0 %331
      %v333 = vsel %vm248, %v217, 0.0
      %v334 = vadd.f32 %v216, %v333
      %335 = vadd.xlane.f32.xlu0 %v334
      %v336 = vpop.xlane.xlu0 %335
      %v337 = vsel %vm248, %v219, 0.0
      %v338 = vadd.f32 %v218, %v337
      %339 = vadd.xlane.f32.xlu0 %v338
      %v340 = vpop.xlane.xlu0 %339
      %v341 = vsel %vm248, %v221, 0.0
      %v342 = vadd.f32 %v220, %v341
      %343 = vadd.xlane.f32.xlu0 %v342
      %v344 = vpop.xlane.xlu0 %343
      %v345 = vsel %vm248, %v223, 0.0
      %v346 = vadd.f32 %v222, %v345
      %347 = vadd.xlane.f32.xlu0 %v346
      %v348 = vpop.xlane.xlu0 %347
      %v349 = vsel %vm248, %v225, 0.0
      %v350 = vadd.f32 %v224, %v349
      %351 = vadd.xlane.f32.xlu0 %v350
      %v352 = vpop.xlane.xlu0 %351
      %v353 = vsel %vm248, %v227, 0.0
      %v354 = vadd.f32 %v226, %v353
      %355 = vadd.xlane.f32.xlu0 %v354
      %v356 = vpop.xlane.xlu0 %355
      %v357 = vsel %vm248, %v229, 0.0
      %v358 = vadd.f32 %v228, %v357
      %359 = vadd.xlane.f32.xlu0 %v358
      %v360 = vpop.xlane.xlu0 %359
      %v361 = vsel %vm248, %v231, 0.0
      %v362 = vadd.f32 %v230, %v361
      %363 = vadd.xlane.f32.xlu0 %v362
      %v364 = vpop.xlane.xlu0 %363
      %v365 = vsel %vm248, %v233, 0.0
      %v366 = vadd.f32 %v232, %v365
      %367 = vadd.xlane.f32.xlu0 %v366
      %v368 = vpop.xlane.xlu0 %367
      %v369 = vsel %vm248, %v235, 0.0
      %v370 = vadd.f32 %v234, %v369
      %371 = vadd.xlane.f32.xlu0 %v370
      %v372 = vpop.xlane.xlu0 %371
      %v373 = vsel %vm248, %v237, 0.0
      %v374 = vadd.f32 %v236, %v373
      %375 = vadd.xlane.f32.xlu0 %v374
      %v376 = vpop.xlane.xlu0 %375
      %v377 = vsel %vm248, %v239, 0.0
      %v378 = vadd.f32 %v238, %v377
      %379 = vadd.xlane.f32.xlu0 %v378
      %v380 = vpop.xlane.xlu0 %379
      %v381 = vsel %vm248, %v241, 0.0
      %v382 = vadd.f32 %v240, %v381
      %383 = vadd.xlane.f32.xlu0 %v382
      %v384 = vpop.xlane.xlu0 %383
      %v385 = vsel %vm248, %v243, 0.0
      %v386 = vadd.f32 %v242, %v385
      %387 = vadd.xlane.f32.xlu0 %v386
      %v388 = vpop.xlane.xlu0 %387
      %v389 = vsel %vm248, %v245, 0.0
      %v390 = vadd.f32 %v244, %v389
      %391 = vadd.xlane.f32.xlu0 %v390
      %v392 = vpop.xlane.xlu0 %391
      %v393 = vsel %vm248, %v247, 0.0
      %v394 = vadd.f32 %v246, %v393
      %395 = vadd.xlane.f32.xlu0 %v394
      %v396 = vpop.xlane.xlu0 %395
      %v397 = vadd.f32 %v252, 0.0
      %v398 = vadd.f32 %v256, 0.0
      %v399 = vadd.f32 %v260, 0.0
      %v400 = vadd.f32 %v264, 0.0
      %v401 = vadd.f32 %v268, 0.0
      %v402 = vadd.f32 %v272, 0.0
      %v403 = vadd.f32 %v276, 0.0
      %v404 = vadd.f32 %v280, 0.0
      %v405 = vadd.f32 %v284, 0.0
      %v406 = vadd.f32 %v288, 0.0
      %v407 = vadd.f32 %v292, 0.0
      %v408 = vadd.f32 %v296, 0.0
      %v409 = vadd.f32 %v300, 0.0
      %v410 = vadd.f32 %v304, 0.0
      %v411 = vadd.f32 %v308, 0.0
      %v412 = vadd.f32 %v312, 0.0
      %v413 = vadd.f32 %v316, 0.0
      %v414 = vadd.f32 %v320, 0.0
      %v415 = vadd.f32 %v324, 0.0
      %v416 = vadd.f32 %v328, 0.0
      %v417 = vadd.f32 %v332, 0.0
      %v418 = vadd.f32 %v336, 0.0
      %v419 = vadd.f32 %v340, 0.0
      %v420 = vadd.f32 %v344, 0.0
      %v421 = vadd.f32 %v348, 0.0
      %v422 = vadd.f32 %v352, 0.0
      %v423 = vadd.f32 %v356, 0.0
      %v424 = vadd.f32 %v360, 0.0
      %v425 = vadd.f32 %v364, 0.0
      %v426 = vadd.f32 %v368, 0.0
      %v427 = vadd.f32 %v372, 0.0
      %v428 = vadd.f32 %v376, 0.0
      %v429 = vadd.f32 %v380, 0.0
      %v430 = vadd.f32 %v384, 0.0
      %v431 = vadd.f32 %v388, 0.0
      %v432 = vadd.f32 %v392, 0.0
      %v433 = vadd.f32 %v396, 0.0
      %v434 = vmul.f32 %v397, 0.0051020407
      %v435 = vmul.f32 %v398, 0.0051020407
      %v436 = vmul.f32 %v399, 0.0051020407
      %v437 = vmul.f32 %v400, 0.0051020407
      %v438 = vmul.f32 %v401, 0.0051020407
      %v439 = vmul.f32 %v402, 0.0051020407
      %v440 = vmul.f32 %v403, 0.0051020407
      %v441 = vmul.f32 %v404, 0.0051020407
      %v442 = vmul.f32 %v405, 0.0051020407
      %v443 = vmul.f32 %v406, 0.0051020407
      %v444 = vmul.f32 %v407, 0.0051020407
      %v445 = vmul.f32 %v408, 0.0051020407
      %v446 = vmul.f32 %v409, 0.0051020407
      %v447 = vmul.f32 %v410, 0.0051020407
      %v448 = vmul.f32 %v411, 0.0051020407
      %v449 = vmul.f32 %v412, 0.0051020407
      %v450 = vmul.f32 %v413, 0.0051020407
      %v451 = vmul.f32 %v414, 0.0051020407
      %v452 = vmul.f32 %v415, 0.0051020407
      %v453 = vmul.f32 %v416, 0.0051020407
      %v454 = vmul.f32 %v417, 0.0051020407
      %v455 = vmul.f32 %v418, 0.0051020407
      %v456 = vmul.f32 %v419, 0.0051020407
      %v457 = vmul.f32 %v420, 0.0051020407
      %v458 = vmul.f32 %v421, 0.0051020407
      %v459 = vmul.f32 %v422, 0.0051020407
      %v460 = vmul.f32 %v423, 0.0051020407
      %v461 = vmul.f32 %v424, 0.0051020407
      %v462 = vmul.f32 %v425, 0.0051020407
      %v463 = vmul.f32 %v426, 0.0051020407
      %v464 = vmul.f32 %v427, 0.0051020407
      %v465 = vmul.f32 %v428, 0.0051020407
      %v466 = vmul.f32 %v429, 0.0051020407
      %v467 = vmul.f32 %v430, 0.0051020407
      %v468 = vmul.f32 %v431, 0.0051020407
      %v469 = vmul.f32 %v432, 0.0051020407
      %v470 = vmul.f32 %v433, 0.0051020407
      %v471 = vsub.f32 %v174, %v434
      %v472 = vsub.f32 %v175, %v434
      %v473 = vsub.f32 %v176, %v435
      %v474 = vsub.f32 %v177, %v435
      %v475 = vsub.f32 %v178, %v436
      %v476 = vsub.f32 %v179, %v436
      %v477 = vsub.f32 %v180, %v437
      %v478 = vsub.f32 %v181, %v437
      %v479 = vsub.f32 %v182, %v438
      %v480 = vsub.f32 %v183, %v438
      %v481 = vsub.f32 %v184, %v439
      %v482 = vsub.f32 %v185, %v439
      %v483 = vsub.f32 %v186, %v440
      %v484 = vsub.f32 %v187, %v440
      %v485 = vsub.f32 %v188, %v441
      %v486 = vsub.f32 %v189, %v441
      %v487 = vsub.f32 %v190, %v442
      %v488 = vsub.f32 %v191, %v442
      %v489 = vsub.f32 %v192, %v443
      %v490 = vsub.f32 %v193, %v443
      %v491 = vsub.f32 %v194, %v444
      %v492 = vsub.f32 %v195, %v444
      %v493 = vsub.f32 %v196, %v445
      %v494 = vsub.f32 %v197, %v445
      %v495 = vsub.f32 %v198, %v446
      %v496 = vsub.f32 %v199, %v446
      %v497 = vsub.f32 %v200, %v447
      %v498 = vsub.f32 %v201, %v447
      %v499 = vsub.f32 %v202, %v448
      %v500 = vsub.f32 %v203, %v448
      %v501 = vsub.f32 %v204, %v449
      %v502 = vsub.f32 %v205, %v449
      %v503 = vsub.f32 %v206, %v450
      %v504 = vsub.f32 %v207, %v450
      %v505 = vsub.f32 %v208, %v451
      %v506 = vsub.f32 %v209, %v451
      %v507 = vsub.f32 %v210, %v452
      %v508 = vsub.f32 %v211, %v452
      %v509 = vsub.f32 %v212, %v453
      %v510 = vsub.f32 %v213, %v453
      %v511 = vsub.f32 %v214, %v454
      %v512 = vsub.f32 %v215, %v454
      %v513 = vsub.f32 %v216, %v455
      %v514 = vsub.f32 %v217, %v455
      %v515 = vsub.f32 %v218, %v456
      %v516 = vsub.f32 %v219, %v456
      %v517 = vsub.f32 %v220, %v457
      %v518 = vsub.f32 %v221, %v457
      %v519 = vsub.f32 %v222, %v458
      %v520 = vsub.f32 %v223, %v458
      %v521 = vsub.f32 %v224, %v459
      %v522 = vsub.f32 %v225, %v459
      %v523 = vsub.f32 %v226, %v460
      %v524 = vsub.f32 %v227, %v460
      %v525 = vsub.f32 %v228, %v461
      %v526 = vsub.f32 %v229, %v461
      %v527 = vsub.f32 %v230, %v462
      %v528 = vsub.f32 %v231, %v462
      %v529 = vsub.f32 %v232, %v463
      %v530 = vsub.f32 %v233, %v463
      %v531 = vsub.f32 %v234, %v464
      %v532 = vsub.f32 %v235, %v464
      %v533 = vsub.f32 %v236, %v465
      %v534 = vsub.f32 %v237, %v465
      %v535 = vsub.f32 %v238, %v466
      %v536 = vsub.f32 %v239, %v466
      %v537 = vsub.f32 %v240, %v467
      %v538 = vsub.f32 %v241, %v467
      %v539 = vsub.f32 %v242, %v468
      %v540 = vsub.f32 %v243, %v468
      %v541 = vsub.f32 %v244, %v469
      %v542 = vsub.f32 %v245, %v469
      %v543 = vsub.f32 %v246, %v470
      %v544 = vsub.f32 %v247, %v470
      %v545 = vmul.f32 %v471, %v471
      %v546 = vmul.f32 %v472, %v472
      %v547 = vmul.f32 %v473, %v473
      %v548 = vmul.f32 %v474, %v474
      %v549 = vmul.f32 %v475, %v475
      %v550 = vmul.f32 %v476, %v476
      %v551 = vmul.f32 %v477, %v477
      %v552 = vmul.f32 %v478, %v478
      %v553 = vmul.f32 %v479, %v479
      %v554 = vmul.f32 %v480, %v480
      %v555 = vmul.f32 %v481, %v481
      %v556 = vmul.f32 %v482, %v482
      %v557 = vmul.f32 %v483, %v483
      %v558 = vmul.f32 %v484, %v484
      %v559 = vmul.f32 %v485, %v485
      %v560 = vmul.f32 %v486, %v486
      %v561 = vmul.f32 %v487, %v487
      %v562 = vmul.f32 %v488, %v488
      %v563 = vmul.f32 %v489, %v489
      %v564 = vmul.f32 %v490, %v490
      %v565 = vmul.f32 %v491, %v491
      %v566 = vmul.f32 %v492, %v492
      %v567 = vmul.f32 %v493, %v493
      %v568 = vmul.f32 %v494, %v494
      %v569 = vmul.f32 %v495, %v495
      %v570 = vmul.f32 %v496, %v496
      %v571 = vmul.f32 %v497, %v497
      %v572 = vmul.f32 %v498, %v498
      %v573 = vmul.f32 %v499, %v499
      %v574 = vmul.f32 %v500, %v500
      %v575 = vmul.f32 %v501, %v501
      %v576 = vmul.f32 %v502, %v502
      %v577 = vmul.f32 %v503, %v503
      %v578 = vmul.f32 %v504, %v504
      %v579 = vmul.f32 %v505, %v505
      %v580 = vmul.f32 %v506, %v506
      %v581 = vmul.f32 %v507, %v507
      %v582 = vmul.f32 %v508, %v508
      %v583 = vmul.f32 %v509, %v509
      %v584 = vmul.f32 %v510, %v510
      %v585 = vmul.f32 %v511, %v511
      %v586 = vmul.f32 %v512, %v512
      %v587 = vmul.f32 %v513, %v513
      %v588 = vmul.f32 %v514, %v514
      %v589 = vmul.f32 %v515, %v515
      %v590 = vmul.f32 %v516, %v516
      %v591 = vmul.f32 %v517, %v517
      %v592 = vmul.f32 %v518, %v518
      %v593 = vmul.f32 %v519, %v519
      %v594 = vmul.f32 %v520, %v520
      %v595 = vmul.f32 %v521, %v521
      %v596 = vmul.f32 %v522, %v522
      %v597 = vmul.f32 %v523, %v523
      %v598 = vmul.f32 %v524, %v524
      %v599 = vmul.f32 %v525, %v525
      %v600 = vmul.f32 %v526, %v526
      %v601 = vmul.f32 %v527, %v527
      %v602 = vmul.f32 %v528, %v528
      %v603 = vmul.f32 %v529, %v529
      %v604 = vmul.f32 %v530, %v530
      %v605 = vmul.f32 %v531, %v531
      %v606 = vmul.f32 %v532, %v532
      %v607 = vmul.f32 %v533, %v533
      %v608 = vmul.f32 %v534, %v534
      %v609 = vmul.f32 %v535, %v535
      %v610 = vmul.f32 %v536, %v536
      %v611 = vmul.f32 %v537, %v537
      %v612 = vmul.f32 %v538, %v538
      %v613 = vmul.f32 %v539, %v539
      %v614 = vmul.f32 %v540, %v540
      %v615 = vmul.f32 %v541, %v541
      %v616 = vmul.f32 %v542, %v542
      %v617 = vmul.f32 %v543, %v543
      %v618 = vmul.f32 %v544, %v544
      %v619 = vsel %vm248, %v546, 0.0
      %v620 = vadd.f32 %v545, %v619
      %621 = vadd.xlane.f32.xlu0 %v620
      %v622 = vpop.xlane.xlu0 %621
      %v623 = vsel %vm248, %v548, 0.0
      %v624 = vadd.f32 %v547, %v623
      %625 = vadd.xlane.f32.xlu0 %v624
      %v626 = vpop.xlane.xlu0 %625
      %v627 = vsel %vm248, %v550, 0.0
      %v628 = vadd.f32 %v549, %v627
      %629 = vadd.xlane.f32.xlu0 %v628
      %v630 = vpop.xlane.xlu0 %629
      %v631 = vsel %vm248, %v552, 0.0
      %v632 = vadd.f32 %v551, %v631
      %633 = vadd.xlane.f32.xlu0 %v632
      %v634 = vpop.xlane.xlu0 %633
      %v635 = vsel %vm248, %v554, 0.0
      %v636 = vadd.f32 %v553, %v635
      %637 = vadd.xlane.f32.xlu0 %v636
      %v638 = vpop.xlane.xlu0 %637
      %v639 = vsel %vm248, %v556, 0.0
      %v640 = vadd.f32 %v555, %v639
      %641 = vadd.xlane.f32.xlu0 %v640
      %v642 = vpop.xlane.xlu0 %641
      %v643 = vsel %vm248, %v558, 0.0
      %v644 = vadd.f32 %v557, %v643
      %645 = vadd.xlane.f32.xlu0 %v644
      %v646 = vpop.xlane.xlu0 %645
      %v647 = vsel %vm248, %v560, 0.0
      %v648 = vadd.f32 %v559, %v647
      %649 = vadd.xlane.f32.xlu0 %v648
      %v650 = vpop.xlane.xlu0 %649
      %v651 = vsel %vm248, %v562, 0.0
      %v652 = vadd.f32 %v561, %v651
      %653 = vadd.xlane.f32.xlu0 %v652
      %v654 = vpop.xlane.xlu0 %653
      %v655 = vsel %vm248, %v564, 0.0
      %v656 = vadd.f32 %v563, %v655
      %657 = vadd.xlane.f32.xlu0 %v656
      %v658 = vpop.xlane.xlu0 %657
      %v659 = vsel %vm248, %v566, 0.0
      %v660 = vadd.f32 %v565, %v659
      %661 = vadd.xlane.f32.xlu0 %v660
      %v662 = vpop.xlane.xlu0 %661
      %v663 = vsel %vm248, %v568, 0.0
      %v664 = vadd.f32 %v567, %v663
      %665 = vadd.xlane.f32.xlu0 %v664
      %v666 = vpop.xlane.xlu0 %665
      %v667 = vsel %vm248, %v570, 0.0
      %v668 = vadd.f32 %v569, %v667
      %669 = vadd.xlane.f32.xlu0 %v668
      %v670 = vpop.xlane.xlu0 %669
      %v671 = vsel %vm248, %v572, 0.0
      %v672 = vadd.f32 %v571, %v671
      %673 = vadd.xlane.f32.xlu0 %v672
      %v674 = vpop.xlane.xlu0 %673
      %v675 = vsel %vm248, %v574, 0.0
      %v676 = vadd.f32 %v573, %v675
      %677 = vadd.xlane.f32.xlu0 %v676
      %v678 = vpop.xlane.xlu0 %677
      %v679 = vsel %vm248, %v576, 0.0
      %v680 = vadd.f32 %v575, %v679
      %681 = vadd.xlane.f32.xlu0 %v680
      %v682 = vpop.xlane.xlu0 %681
      %v683 = vsel %vm248, %v578, 0.0
      %v684 = vadd.f32 %v577, %v683
      %685 = vadd.xlane.f32.xlu0 %v684
      %v686 = vpop.xlane.xlu0 %685
      %v687 = vsel %vm248, %v580, 0.0
      %v688 = vadd.f32 %v579, %v687
      %689 = vadd.xlane.f32.xlu0 %v688
      %v690 = vpop.xlane.xlu0 %689
      %v691 = vsel %vm248, %v582, 0.0
      %v692 = vadd.f32 %v581, %v691
      %693 = vadd.xlane.f32.xlu0 %v692
      %v694 = vpop.xlane.xlu0 %693
      %v695 = vsel %vm248, %v584, 0.0
      %v696 = vadd.f32 %v583, %v695
      %697 = vadd.xlane.f32.xlu0 %v696
      %v698 = vpop.xlane.xlu0 %697
      %v699 = vsel %vm248, %v586, 0.0
      %v700 = vadd.f32 %v585, %v699
      %701 = vadd.xlane.f32.xlu0 %v700
      %v702 = vpop.xlane.xlu0 %701
      %v703 = vsel %vm248, %v588, 0.0
      %v704 = vadd.f32 %v587, %v703
      %705 = vadd.xlane.f32.xlu0 %v704
      %v706 = vpop.xlane.xlu0 %705
      %v707 = vsel %vm248, %v590, 0.0
      %v708 = vadd.f32 %v589, %v707
      %709 = vadd.xlane.f32.xlu0 %v708
      %v710 = vpop.xlane.xlu0 %709
      %v711 = vsel %vm248, %v592, 0.0
      %v712 = vadd.f32 %v591, %v711
      %713 = vadd.xlane.f32.xlu0 %v712
      %v714 = vpop.xlane.xlu0 %713
      %v715 = vsel %vm248, %v594, 0.0
      %v716 = vadd.f32 %v593, %v715
      %717 = vadd.xlane.f32.xlu0 %v716
      %v718 = vpop.xlane.xlu0 %717
      %v719 = vsel %vm248, %v596, 0.0
      %v720 = vadd.f32 %v595, %v719
      %721 = vadd.xlane.f32.xlu0 %v720
      %v722 = vpop.xlane.xlu0 %721
      %v723 = vsel %vm248, %v598, 0.0
      %v724 = vadd.f32 %v597, %v723
      %725 = vadd.xlane.f32.xlu0 %v724
      %v726 = vpop.xlane.xlu0 %725
      %v727 = vsel %vm248, %v600, 0.0
      %v728 = vadd.f32 %v599, %v727
      %729 = vadd.xlane.f32.xlu0 %v728
      %v730 = vpop.xlane.xlu0 %729
      %v731 = vsel %vm248, %v602, 0.0
      %v732 = vadd.f32 %v601, %v731
      %733 = vadd.xlane.f32.xlu0 %v732
      %v734 = vpop.xlane.xlu0 %733
      %v735 = vsel %vm248, %v604, 0.0
      %v736 = vadd.f32 %v603, %v735
      %737 = vadd.xlane.f32.xlu0 %v736
      %v738 = vpop.xlane.xlu0 %737
      %v739 = vsel %vm248, %v606, 0.0
      %v740 = vadd.f32 %v605, %v739
      %741 = vadd.xlane.f32.xlu0 %v740
      %v742 = vpop.xlane.xlu0 %741
      %v743 = vsel %vm248, %v608, 0.0
      %v744 = vadd.f32 %v607, %v743
      %745 = vadd.xlane.f32.xlu0 %v744
      %v746 = vpop.xlane.xlu0 %745
      %v747 = vsel %vm248, %v610, 0.0
      %v748 = vadd.f32 %v609, %v747
      %749 = vadd.xlane.f32.xlu0 %v748
      %v750 = vpop.xlane.xlu0 %749
      %v751 = vsel %vm248, %v612, 0.0
      %v752 = vadd.f32 %v611, %v751
      %753 = vadd.xlane.f32.xlu0 %v752
      %v754 = vpop.xlane.xlu0 %753
      %v755 = vsel %vm248, %v614, 0.0
      %v756 = vadd.f32 %v613, %v755
      %757 = vadd.xlane.f32.xlu0 %v756
      %v758 = vpop.xlane.xlu0 %757
      %v759 = vsel %vm248, %v616, 0.0
      %v760 = vadd.f32 %v615, %v759
      %761 = vadd.xlane.f32.xlu0 %v760
      %v762 = vpop.xlane.xlu0 %761
      %v763 = vsel %vm248, %v618, 0.0
      %v764 = vadd.f32 %v617, %v763
      %765 = vadd.xlane.f32.xlu0 %v764
      %v766 = vpop.xlane.xlu0 %765
      %v767 = vadd.f32 %v622, 0.0
      %v768 = vadd.f32 %v626, 0.0
      %v769 = vadd.f32 %v630, 0.0
      %v770 = vadd.f32 %v634, 0.0
      %v771 = vadd.f32 %v638, 0.0
      %v772 = vadd.f32 %v642, 0.0
      %v773 = vadd.f32 %v646, 0.0
      %v774 = vadd.f32 %v650, 0.0
      %v775 = vadd.f32 %v654, 0.0
      %v776 = vadd.f32 %v658, 0.0
      %v777 = vadd.f32 %v662, 0.0
      %v778 = vadd.f32 %v666, 0.0
      %v779 = vadd.f32 %v670, 0.0
      %v780 = vadd.f32 %v674, 0.0
      %v781 = vadd.f32 %v678, 0.0
      %v782 = vadd.f32 %v682, 0.0
      %v783 = vadd.f32 %v686, 0.0
      %v784 = vadd.f32 %v690, 0.0
      %v785 = vadd.f32 %v694, 0.0
      %v786 = vadd.f32 %v698, 0.0
      %v787 = vadd.f32 %v702, 0.0
      %v788 = vadd.f32 %v706, 0.0
      %v789 = vadd.f32 %v710, 0.0
      %v790 = vadd.f32 %v714, 0.0
      %v791 = vadd.f32 %v718, 0.0
      %v792 = vadd.f32 %v722, 0.0
      %v793 = vadd.f32 %v726, 0.0
      %v794 = vadd.f32 %v730, 0.0
      %v795 = vadd.f32 %v734, 0.0
      %v796 = vadd.f32 %v738, 0.0
      %v797 = vadd.f32 %v742, 0.0
      %v798 = vadd.f32 %v746, 0.0
      %v799 = vadd.f32 %v750, 0.0
      %v800 = vadd.f32 %v754, 0.0
      %v801 = vadd.f32 %v758, 0.0
      %v802 = vadd.f32 %v762, 0.0
      %v803 = vadd.f32 %v766, 0.0
      %v804 = vmul.f32 %v767, 0.0051020407
      %v805 = vmul.f32 %v768, 0.0051020407
      %v806 = vmul.f32 %v769, 0.0051020407
      %v807 = vmul.f32 %v770, 0.0051020407
      %v808 = vmul.f32 %v771, 0.0051020407
      %v809 = vmul.f32 %v772, 0.0051020407
      %v810 = vmul.f32 %v773, 0.0051020407
      %v811 = vmul.f32 %v774, 0.0051020407
      %v812 = vmul.f32 %v775, 0.0051020407
      %v813 = vmul.f32 %v776, 0.0051020407
      %v814 = vmul.f32 %v777, 0.0051020407
      %v815 = vmul.f32 %v778, 0.0051020407
      %v816 = vmul.f32 %v779, 0.0051020407
      %v817 = vmul.f32 %v780, 0.0051020407
      %v818 = vmul.f32 %v781, 0.0051020407
      %v819 = vmul.f32 %v782, 0.0051020407
      %v820 = vmul.f32 %v783, 0.0051020407
      %v821 = vmul.f32 %v784, 0.0051020407
      %v822 = vmul.f32 %v785, 0.0051020407
      %v823 = vmul.f32 %v786, 0.0051020407
      %v824 = vmul.f32 %v787, 0.0051020407
      %v825 = vmul.f32 %v788, 0.0051020407
      %v826 = vmul.f32 %v789, 0.0051020407
      %v827 = vmul.f32 %v790, 0.0051020407
      %v828 = vmul.f32 %v791, 0.0051020407
      %v829 = vmul.f32 %v792, 0.0051020407
      %v830 = vmul.f32 %v793, 0.0051020407
      %v831 = vmul.f32 %v794, 0.0051020407
      %v832 = vmul.f32 %v795, 0.0051020407
      %v833 = vmul.f32 %v796, 0.0051020407
      %v834 = vmul.f32 %v797, 0.0051020407
      %v835 = vmul.f32 %v798, 0.0051020407
      %v836 = vmul.f32 %v799, 0.0051020407
      %v837 = vmul.f32 %v800, 0.0051020407
      %v838 = vmul.f32 %v801, 0.0051020407
      %v839 = vmul.f32 %v802, 0.0051020407
      %v840 = vmul.f32 %v803, 0.0051020407
      %v841 = vadd.f32 %v804, 1e-05
      %v842 = vadd.f32 %v805, 1e-05
      %v843 = vadd.f32 %v806, 1e-05
      %v844 = vadd.f32 %v807, 1e-05
      %v845 = vadd.f32 %v808, 1e-05
      %v846 = vadd.f32 %v809, 1e-05
      %v847 = vadd.f32 %v810, 1e-05
      %v848 = vadd.f32 %v811, 1e-05
      %v849 = vadd.f32 %v812, 1e-05
      %v850 = vadd.f32 %v813, 1e-05
      %v851 = vadd.f32 %v814, 1e-05
      %v852 = vadd.f32 %v815, 1e-05
      %v853 = vadd.f32 %v816, 1e-05
      %v854 = vadd.f32 %v817, 1e-05
      %v855 = vadd.f32 %v818, 1e-05
      %v856 = vadd.f32 %v819, 1e-05
      %v857 = vadd.f32 %v820, 1e-05
      %v858 = vadd.f32 %v821, 1e-05
      %v859 = vadd.f32 %v822, 1e-05
      %v860 = vadd.f32 %v823, 1e-05
      %v861 = vadd.f32 %v824, 1e-05
      %v862 = vadd.f32 %v825, 1e-05
      %v863 = vadd.f32 %v826, 1e-05
      %v864 = vadd.f32 %v827, 1e-05
      %v865 = vadd.f32 %v828, 1e-05
      %v866 = vadd.f32 %v829, 1e-05
      %v867 = vadd.f32 %v830, 1e-05
      %v868 = vadd.f32 %v831, 1e-05
      %v869 = vadd.f32 %v832, 1e-05
      %v870 = vadd.f32 %v833, 1e-05
      %v871 = vadd.f32 %v834, 1e-05
      %v872 = vadd.f32 %v835, 1e-05
      %v873 = vadd.f32 %v836, 1e-05
      %v874 = vadd.f32 %v837, 1e-05
      %v875 = vadd.f32 %v838, 1e-05
      %v876 = vadd.f32 %v839, 1e-05
      %v877 = vadd.f32 %v840, 1e-05
      %v878 = vrsqrt.pop %v841
      %v879 = vrsqrt.pop %v842
      %v880 = vrsqrt.pop %v843
      %v881 = vrsqrt.pop %v844
      %v882 = vrsqrt.pop %v845
      %v883 = vrsqrt.pop %v846
      %v884 = vrsqrt.pop %v847
      %v885 = vrsqrt.pop %v848
      %v886 = vrsqrt.pop %v849
      %v887 = vrsqrt.pop %v850
      %v888 = vrsqrt.pop %v851
      %v889 = vrsqrt.pop %v852
      %v890 = vrsqrt.pop %v853
      %v891 = vrsqrt.pop %v854
      %v892 = vrsqrt.pop %v855
      %v893 = vrsqrt.pop %v856
      %v894 = vrsqrt.pop %v857
      %v895 = vrsqrt.pop %v858
      %v896 = vrsqrt.pop %v859
      %v897 = vrsqrt.pop %v860
      %v898 = vrsqrt.pop %v861
      %v899 = vrsqrt.pop %v862
      %v900 = vrsqrt.pop %v863
      %v901 = vrsqrt.pop %v864
      %v902 = vrsqrt.pop %v865
      %v903 = vrsqrt.pop %v866
      %v904 = vrsqrt.pop %v867
      %v905 = vrsqrt.pop %v868
      %v906 = vrsqrt.pop %v869
      %v907 = vrsqrt.pop %v870
      %v908 = vrsqrt.pop %v871
      %v909 = vrsqrt.pop %v872
      %v910 = vrsqrt.pop %v873
      %v911 = vrsqrt.pop %v874
      %v912 = vrsqrt.pop %v875
      %v913 = vrsqrt.pop %v876
      %v914 = vrsqrt.pop %v877
      %v915 = vld [vmem:[%s165] sm:$0xff]
      %v916 = vld [vmem:[%s165 + $0x8] sm:$0xff]
      %v917 = vld [vmem:[%s165 + $0x10] sm:$0xff]
      %v918 = vld [vmem:[%s165 + $0x18] sm:$0xff]
      %v919 = vld [vmem:[%s165 + $0x20] sm:$0xff]
      %v920 = vld [vmem:[%s165 + $0x28] sm:$0xff]
      %v921 = vld [vmem:[%s165 + $0x30] sm:$0xff]
      %v922 = vld [vmem:[%s165 + $0x38] sm:$0xff]
      %v923 = vld [vmem:[%s165 + $0x40] sm:$0xff]
      %v924 = vld [vmem:[%s165 + $0x48] sm:$0xff]
      %v925 = vld [vmem:[%s165 + $0x50] sm:$0xff]
      %v926 = vld [vmem:[%s165 + $0x58] sm:$0xff]
      %v927 = vld [vmem:[%s165 + $0x60] sm:$0xff]
      %v928 = vld [vmem:[%s165 + $0x68] sm:$0xff]
      %v929 = vld [vmem:[%s165 + $0x70] sm:$0xff]
      %v930 = vld [vmem:[%s165 + $0x78] sm:$0xff]
      %v931 = vld [vmem:[%s165 + $0x80] sm:$0xff]
      %v932 = vld [vmem:[%s165 + $0x88] sm:$0xff]
      %v933 = vld [vmem:[%s165 + $0x90] sm:$0xff]
      %v934 = vld [vmem:[%s165 + $0x98] sm:$0xff]
      %v935 = vld [vmem:[%s165 + $0xa0] sm:$0xff]
      %v936 = vld [vmem:[%s165 + $0xa8] sm:$0xff]
      %v937 = vld [vmem:[%s165 + $0xb0] sm:$0xff]
      %v938 = vld [vmem:[%s165 + $0xb8] sm:$0xff]
      %v939 = vld [vmem:[%s165 + $0xc0] sm:$0xff]
      %v940 = vld [vmem:[%s165 + $0xc8] sm:$0xff]
      %v941 = vld [vmem:[%s165 + $0xd0] sm:$0xff]
      %v942 = vld [vmem:[%s165 + $0xd8] sm:$0xff]
      %v943 = vld [vmem:[%s165 + $0xe0] sm:$0xff]
      %v944 = vld [vmem:[%s165 + $0xe8] sm:$0xff]
      %v945 = vld [vmem:[%s165 + $0xf0] sm:$0xff]
      %v946 = vld [vmem:[%s165 + $0xf8] sm:$0xff]
      %v947 = vld [vmem:[%s165 + $0x100] sm:$0xff]
      %v948 = vld [vmem:[%s165 + $0x108] sm:$0xff]
      %v949 = vld [vmem:[%s165 + $0x110] sm:$0xff]
      %v950 = vld [vmem:[%s165 + $0x118] sm:$0xff]
      %v951 = vld [vmem:[%s165 + $0x120] sm:$0xff]
      %v952 = vmul.f32 %v878, %v915
      %v953 = vmul.f32 %v879, %v916
      %v954 = vmul.f32 %v880, %v917
      %v955 = vmul.f32 %v881, %v918
      %v956 = vmul.f32 %v882, %v919
      %v957 = vmul.f32 %v883, %v920
      %v958 = vmul.f32 %v884, %v921
      %v959 = vmul.f32 %v885, %v922
      %v960 = vmul.f32 %v886, %v923
      %v961 = vmul.f32 %v887, %v924
      %v962 = vmul.f32 %v888, %v925
      %v963 = vmul.f32 %v889, %v926
      %v964 = vmul.f32 %v890, %v927
      %v965 = vmul.f32 %v891, %v928
      %v966 = vmul.f32 %v892, %v929
      %v967 = vmul.f32 %v893, %v930
      %v968 = vmul.f32 %v894, %v931
      %v969 = vmul.f32 %v895, %v932
      %v970 = vmul.f32 %v896, %v933
      %v971 = vmul.f32 %v897, %v934
      %v972 = vmul.f32 %v898, %v935
      %v973 = vmul.f32 %v899, %v936
      %v974 = vmul.f32 %v900, %v937
      %v975 = vmul.f32 %v901, %v938
      %v976 = vmul.f32 %v902, %v939
      %v977 = vmul.f32 %v903, %v940
      %v978 = vmul.f32 %v904, %v941
      %v979 = vmul.f32 %v905, %v942
      %v980 = vmul.f32 %v906, %v943
      %v981 = vmul.f32 %v907, %v944
      %v982 = vmul.f32 %v908, %v945
      %v983 = vmul.f32 %v909, %v946
      %v984 = vmul.f32 %v910, %v947
      %v985 = vmul.f32 %v911, %v948
      %v986 = vmul.f32 %v912, %v949
      %v987 = vmul.f32 %v913, %v950
      %v988 = vmul.f32 %v914, %v951
      %990 = vset.pattern.permute.xlu0 0
      %991 = vperm.xlu0 %990, %v952
      %v992 = vpop.permute.xlu0 %991
      %995 = vset.pattern.permute.xlu0 0
      %996 = vperm.xlu0 %995, %v953
      %v997 = vpop.permute.xlu0 %996
      %1000 = vset.pattern.permute.xlu0 0
      %1001 = vperm.xlu0 %1000, %v954
      %v1002 = vpop.permute.xlu0 %1001
      %1005 = vset.pattern.permute.xlu0 0
      %1006 = vperm.xlu0 %1005, %v955
      %v1007 = vpop.permute.xlu0 %1006
      %1010 = vset.pattern.permute.xlu0 0
      %1011 = vperm.xlu0 %1010, %v956
      %v1012 = vpop.permute.xlu0 %1011
      %1015 = vset.pattern.permute.xlu0 0
      %1016 = vperm.xlu0 %1015, %v957
      %v1017 = vpop.permute.xlu0 %1016
      %1020 = vset.pattern.permute.xlu0 0
      %1021 = vperm.xlu0 %1020, %v958
      %v1022 = vpop.permute.xlu0 %1021
      %1025 = vset.pattern.permute.xlu0 0
      %1026 = vperm.xlu0 %1025, %v959
      %v1027 = vpop.permute.xlu0 %1026
      %1030 = vset.pattern.permute.xlu0 0
      %1031 = vperm.xlu0 %1030, %v960
      %v1032 = vpop.permute.xlu0 %1031
      %1035 = vset.pattern.permute.xlu0 0
      %1036 = vperm.xlu0 %1035, %v961
      %v1037 = vpop.permute.xlu0 %1036
      %1040 = vset.pattern.permute.xlu0 0
      %1041 = vperm.xlu0 %1040, %v962
      %v1042 = vpop.permute.xlu0 %1041
      %1045 = vset.pattern.permute.xlu0 0
      %1046 = vperm.xlu0 %1045, %v963
      %v1047 = vpop.permute.xlu0 %1046
      %1050 = vset.pattern.permute.xlu0 0
      %1051 = vperm.xlu0 %1050, %v964
      %v1052 = vpop.permute.xlu0 %1051
      %1055 = vset.pattern.permute.xlu0 0
      %1056 = vperm.xlu0 %1055, %v965
      %v1057 = vpop.permute.xlu0 %1056
      %1060 = vset.pattern.permute.xlu0 0
      %1061 = vperm.xlu0 %1060, %v966
      %v1062 = vpop.permute.xlu0 %1061
      %1065 = vset.pattern.permute.xlu0 0
      %1066 = vperm.xlu0 %1065, %v967
      %v1067 = vpop.permute.xlu0 %1066
      %1070 = vset.pattern.permute.xlu0 0
      %1071 = vperm.xlu0 %1070, %v968
      %v1072 = vpop.permute.xlu0 %1071
      %1075 = vset.pattern.permute.xlu0 0
      %1076 = vperm.xlu0 %1075, %v969
      %v1077 = vpop.permute.xlu0 %1076
      %1080 = vset.pattern.permute.xlu0 0
      %1081 = vperm.xlu0 %1080, %v970
      %v1082 = vpop.permute.xlu0 %1081
      %1085 = vset.pattern.permute.xlu0 0
      %1086 = vperm.xlu0 %1085, %v971
      %v1087 = vpop.permute.xlu0 %1086
      %1090 = vset.pattern.permute.xlu0 0
      %1091 = vperm.xlu0 %1090, %v972
      %v1092 = vpop.permute.xlu0 %1091
      %1095 = vset.pattern.permute.xlu0 0
      %1096 = vperm.xlu0 %1095, %v973
      %v1097 = vpop.permute.xlu0 %1096
      %1100 = vset.pattern.permute.xlu0 0
      %1101 = vperm.xlu0 %1100, %v974
      %v1102 = vpop.permute.xlu0 %1101
      %1105 = vset.pattern.permute.xlu0 0
      %1106 = vperm.xlu0 %1105, %v975
      %v1107 = vpop.permute.xlu0 %1106
      %1110 = vset.pattern.permute.xlu0 0
      %1111 = vperm.xlu0 %1110, %v976
      %v1112 = vpop.permute.xlu0 %1111
      %1115 = vset.pattern.permute.xlu0 0
      %1116 = vperm.xlu0 %1115, %v977
      %v1117 = vpop.permute.xlu0 %1116
      %1120 = vset.pattern.permute.xlu0 0
      %1121 = vperm.xlu0 %1120, %v978
      %v1122 = vpop.permute.xlu0 %1121
      %1125 = vset.pattern.permute.xlu0 0
      %1126 = vperm.xlu0 %1125, %v979
      %v1127 = vpop.permute.xlu0 %1126
      %1130 = vset.pattern.permute.xlu0 0
      %1131 = vperm.xlu0 %1130, %v980
      %v1132 = vpop.permute.xlu0 %1131
      %1135 = vset.pattern.permute.xlu0 0
      %1136 = vperm.xlu0 %1135, %v981
      %v1137 = vpop.permute.xlu0 %1136
      %1140 = vset.pattern.permute.xlu0 0
      %1141 = vperm.xlu0 %1140, %v982
      %v1142 = vpop.permute.xlu0 %1141
      %1145 = vset.pattern.permute.xlu0 0
      %1146 = vperm.xlu0 %1145, %v983
      %v1147 = vpop.permute.xlu0 %1146
      %1150 = vset.pattern.permute.xlu0 0
      %1151 = vperm.xlu0 %1150, %v984
      %v1152 = vpop.permute.xlu0 %1151
      %1155 = vset.pattern.permute.xlu0 0
      %1156 = vperm.xlu0 %1155, %v985
      %v1157 = vpop.permute.xlu0 %1156
      %1160 = vset.pattern.permute.xlu0 0
      %1161 = vperm.xlu0 %1160, %v986
      %v1162 = vpop.permute.xlu0 %1161
      %1165 = vset.pattern.permute.xlu0 0
      %1166 = vperm.xlu0 %1165, %v987
      %v1167 = vpop.permute.xlu0 %1166
      %1170 = vset.pattern.permute.xlu0 0
      %1171 = vperm.xlu0 %1170, %v988
      %v1172 = vpop.permute.xlu0 %1171
      %v1174 = vmul.f32 %v471, %v992
      %v1175 = vmul.f32 %v472, %v992
      %v1176 = vmul.f32 %v473, %v997
      %v1177 = vmul.f32 %v474, %v997
      %v1178 = vmul.f32 %v475, %v1002
      %v1179 = vmul.f32 %v476, %v1002
      %v1180 = vmul.f32 %v477, %v1007
      %v1181 = vmul.f32 %v478, %v1007
      %v1182 = vmul.f32 %v479, %v1012
      %v1183 = vmul.f32 %v480, %v1012
      %v1184 = vmul.f32 %v481, %v1017
      %v1185 = vmul.f32 %v482, %v1017
      %v1186 = vmul.f32 %v483, %v1022
      %v1187 = vmul.f32 %v484, %v1022
      %v1188 = vmul.f32 %v485, %v1027
      %v1189 = vmul.f32 %v486, %v1027
      %v1190 = vmul.f32 %v487, %v1032
      %v1191 = vmul.f32 %v488, %v1032
      %v1192 = vmul.f32 %v489, %v1037
      %v1193 = vmul.f32 %v490, %v1037
      %v1194 = vmul.f32 %v491, %v1042
      %v1195 = vmul.f32 %v492, %v1042
      %v1196 = vmul.f32 %v493, %v1047
      %v1197 = vmul.f32 %v494, %v1047
      %v1198 = vmul.f32 %v495, %v1052
      %v1199 = vmul.f32 %v496, %v1052
      %v1200 = vmul.f32 %v497, %v1057
      %v1201 = vmul.f32 %v498, %v1057
      %v1202 = vmul.f32 %v499, %v1062
      %v1203 = vmul.f32 %v500, %v1062
      %v1204 = vmul.f32 %v501, %v1067
      %v1205 = vmul.f32 %v502, %v1067
      %v1206 = vmul.f32 %v503, %v1072
      %v1207 = vmul.f32 %v504, %v1072
      %v1208 = vmul.f32 %v505, %v1077
      %v1209 = vmul.f32 %v506, %v1077
      %v1210 = vmul.f32 %v507, %v1082
      %v1211 = vmul.f32 %v508, %v1082
      %v1212 = vmul.f32 %v509, %v1087
      %v1213 = vmul.f32 %v510, %v1087
      %v1214 = vmul.f32 %v511, %v1092
      %v1215 = vmul.f32 %v512, %v1092
      %v1216 = vmul.f32 %v513, %v1097
      %v1217 = vmul.f32 %v514, %v1097
      %v1218 = vmul.f32 %v515, %v1102
      %v1219 = vmul.f32 %v516, %v1102
      %v1220 = vmul.f32 %v517, %v1107
      %v1221 = vmul.f32 %v518, %v1107
      %v1222 = vmul.f32 %v519, %v1112
      %v1223 = vmul.f32 %v520, %v1112
      %v1224 = vmul.f32 %v521, %v1117
      %v1225 = vmul.f32 %v522, %v1117
      %v1226 = vmul.f32 %v523, %v1122
      %v1227 = vmul.f32 %v524, %v1122
      %v1228 = vmul.f32 %v525, %v1127
      %v1229 = vmul.f32 %v526, %v1127
      %v1230 = vmul.f32 %v527, %v1132
      %v1231 = vmul.f32 %v528, %v1132
      %v1232 = vmul.f32 %v529, %v1137
      %v1233 = vmul.f32 %v530, %v1137
      %v1234 = vmul.f32 %v531, %v1142
      %v1235 = vmul.f32 %v532, %v1142
      %v1236 = vmul.f32 %v533, %v1147
      %v1237 = vmul.f32 %v534, %v1147
      %v1238 = vmul.f32 %v535, %v1152
      %v1239 = vmul.f32 %v536, %v1152
      %v1240 = vmul.f32 %v537, %v1157
      %v1241 = vmul.f32 %v538, %v1157
      %v1242 = vmul.f32 %v539, %v1162
      %v1243 = vmul.f32 %v540, %v1162
      %v1244 = vmul.f32 %v541, %v1167
      %v1245 = vmul.f32 %v542, %v1167
      %v1246 = vmul.f32 %v543, %v1172
      %v1247 = vmul.f32 %v544, %v1172
      %1249 = vset.pattern.permute.xlu0 1
      %1250 = vperm.xlu0 %1249, %v915
      %v1251 = vpop.permute.xlu0 %1250
      %1254 = vset.pattern.permute.xlu0 1
      %1255 = vperm.xlu0 %1254, %v916
      %v1256 = vpop.permute.xlu0 %1255
      %1259 = vset.pattern.permute.xlu0 1
      %1260 = vperm.xlu0 %1259, %v917
      %v1261 = vpop.permute.xlu0 %1260
      %1264 = vset.pattern.permute.xlu0 1
      %1265 = vperm.xlu0 %1264, %v918
      %v1266 = vpop.permute.xlu0 %1265
      %1269 = vset.pattern.permute.xlu0 1
      %1270 = vperm.xlu0 %1269, %v919
      %v1271 = vpop.permute.xlu0 %1270
      %1274 = vset.pattern.permute.xlu0 1
      %1275 = vperm.xlu0 %1274, %v920
      %v1276 = vpop.permute.xlu0 %1275
      %1279 = vset.pattern.permute.xlu0 1
      %1280 = vperm.xlu0 %1279, %v921
      %v1281 = vpop.permute.xlu0 %1280
      %1284 = vset.pattern.permute.xlu0 1
      %1285 = vperm.xlu0 %1284, %v922
      %v1286 = vpop.permute.xlu0 %1285
      %1289 = vset.pattern.permute.xlu0 1
      %1290 = vperm.xlu0 %1289, %v923
      %v1291 = vpop.permute.xlu0 %1290
      %1294 = vset.pattern.permute.xlu0 1
      %1295 = vperm.xlu0 %1294, %v924
      %v1296 = vpop.permute.xlu0 %1295
      %1299 = vset.pattern.permute.xlu0 1
      %1300 = vperm.xlu0 %1299, %v925
      %v1301 = vpop.permute.xlu0 %1300
      %1304 = vset.pattern.permute.xlu0 1
      %1305 = vperm.xlu0 %1304, %v926
      %v1306 = vpop.permute.xlu0 %1305
      %1309 = vset.pattern.permute.xlu0 1
      %1310 = vperm.xlu0 %1309, %v927
      %v1311 = vpop.permute.xlu0 %1310
      %1314 = vset.pattern.permute.xlu0 1
      %1315 = vperm.xlu0 %1314, %v928
      %v1316 = vpop.permute.xlu0 %1315
      %1319 = vset.pattern.permute.xlu0 1
      %1320 = vperm.xlu0 %1319, %v929
      %v1321 = vpop.permute.xlu0 %1320
      %1324 = vset.pattern.permute.xlu0 1
      %1325 = vperm.xlu0 %1324, %v930
      %v1326 = vpop.permute.xlu0 %1325
      %1329 = vset.pattern.permute.xlu0 1
      %1330 = vperm.xlu0 %1329, %v931
      %v1331 = vpop.permute.xlu0 %1330
      %1334 = vset.pattern.permute.xlu0 1
      %1335 = vperm.xlu0 %1334, %v932
      %v1336 = vpop.permute.xlu0 %1335
      %1339 = vset.pattern.permute.xlu0 1
      %1340 = vperm.xlu0 %1339, %v933
      %v1341 = vpop.permute.xlu0 %1340
      %1344 = vset.pattern.permute.xlu0 1
      %1345 = vperm.xlu0 %1344, %v934
      %v1346 = vpop.permute.xlu0 %1345
      %1349 = vset.pattern.permute.xlu0 1
      %1350 = vperm.xlu0 %1349, %v935
      %v1351 = vpop.permute.xlu0 %1350
      %1354 = vset.pattern.permute.xlu0 1
      %1355 = vperm.xlu0 %1354, %v936
      %v1356 = vpop.permute.xlu0 %1355
      %1359 = vset.pattern.permute.xlu0 1
      %1360 = vperm.xlu0 %1359, %v937
      %v1361 = vpop.permute.xlu0 %1360
      %1364 = vset.pattern.permute.xlu0 1
      %1365 = vperm.xlu0 %1364, %v938
      %v1366 = vpop.permute.xlu0 %1365
      %1369 = vset.pattern.permute.xlu0 1
      %1370 = vperm.xlu0 %1369, %v939
      %v1371 = vpop.permute.xlu0 %1370
      %1374 = vset.pattern.permute.xlu0 1
      %1375 = vperm.xlu0 %1374, %v940
      %v1376 = vpop.permute.xlu0 %1375
      %1379 = vset.pattern.permute.xlu0 1
      %1380 = vperm.xlu0 %1379, %v941
      %v1381 = vpop.permute.xlu0 %1380
      %1384 = vset.pattern.permute.xlu0 1
      %1385 = vperm.xlu0 %1384, %v942
      %v1386 = vpop.permute.xlu0 %1385
      %1389 = vset.pattern.permute.xlu0 1
      %1390 = vperm.xlu0 %1389, %v943
      %v1391 = vpop.permute.xlu0 %1390
      %1394 = vset.pattern.permute.xlu0 1
      %1395 = vperm.xlu0 %1394, %v944
      %v1396 = vpop.permute.xlu0 %1395
      %1399 = vset.pattern.permute.xlu0 1
      %1400 = vperm.xlu0 %1399, %v945
      %v1401 = vpop.permute.xlu0 %1400
      %1404 = vset.pattern.permute.xlu0 1
      %1405 = vperm.xlu0 %1404, %v946
      %v1406 = vpop.permute.xlu0 %1405
      %1409 = vset.pattern.permute.xlu0 1
      %1410 = vperm.xlu0 %1409, %v947
      %v1411 = vpop.permute.xlu0 %1410
      %1414 = vset.pattern.permute.xlu0 1
      %1415 = vperm.xlu0 %1414, %v948
      %v1416 = vpop.permute.xlu0 %1415
      %1419 = vset.pattern.permute.xlu0 1
      %1420 = vperm.xlu0 %1419, %v949
      %v1421 = vpop.permute.xlu0 %1420
      %1424 = vset.pattern.permute.xlu0 1
      %1425 = vperm.xlu0 %1424, %v950
      %v1426 = vpop.permute.xlu0 %1425
      %1429 = vset.pattern.permute.xlu0 1
      %1430 = vperm.xlu0 %1429, %v951
      %v1431 = vpop.permute.xlu0 %1430
      %v1433 = vadd.f32 %v1174, %v1251
      %v1434 = vadd.f32 %v1175, %v1251
      %v1435 = vadd.f32 %v1176, %v1256
      %v1436 = vadd.f32 %v1177, %v1256
      %v1437 = vadd.f32 %v1178, %v1261
      %v1438 = vadd.f32 %v1179, %v1261
      %v1439 = vadd.f32 %v1180, %v1266
      %v1440 = vadd.f32 %v1181, %v1266
      %v1441 = vadd.f32 %v1182, %v1271
      %v1442 = vadd.f32 %v1183, %v1271
      %v1443 = vadd.f32 %v1184, %v1276
      %v1444 = vadd.f32 %v1185, %v1276
      %v1445 = vadd.f32 %v1186, %v1281
      %v1446 = vadd.f32 %v1187, %v1281
      %v1447 = vadd.f32 %v1188, %v1286
      %v1448 = vadd.f32 %v1189, %v1286
      %v1449 = vadd.f32 %v1190, %v1291
      %v1450 = vadd.f32 %v1191, %v1291
      %v1451 = vadd.f32 %v1192, %v1296
      %v1452 = vadd.f32 %v1193, %v1296
      %v1453 = vadd.f32 %v1194, %v1301
      %v1454 = vadd.f32 %v1195, %v1301
      %v1455 = vadd.f32 %v1196, %v1306
      %v1456 = vadd.f32 %v1197, %v1306
      %v1457 = vadd.f32 %v1198, %v1311
      %v1458 = vadd.f32 %v1199, %v1311
      %v1459 = vadd.f32 %v1200, %v1316
      %v1460 = vadd.f32 %v1201, %v1316
      %v1461 = vadd.f32 %v1202, %v1321
      %v1462 = vadd.f32 %v1203, %v1321
      %v1463 = vadd.f32 %v1204, %v1326
      %v1464 = vadd.f32 %v1205, %v1326
      %v1465 = vadd.f32 %v1206, %v1331
      %v1466 = vadd.f32 %v1207, %v1331
      %v1467 = vadd.f32 %v1208, %v1336
      %v1468 = vadd.f32 %v1209, %v1336
      %v1469 = vadd.f32 %v1210, %v1341
      %v1470 = vadd.f32 %v1211, %v1341
      %v1471 = vadd.f32 %v1212, %v1346
      %v1472 = vadd.f32 %v1213, %v1346
      %v1473 = vadd.f32 %v1214, %v1351
      %v1474 = vadd.f32 %v1215, %v1351
      %v1475 = vadd.f32 %v1216, %v1356
      %v1476 = vadd.f32 %v1217, %v1356
      %v1477 = vadd.f32 %v1218, %v1361
      %v1478 = vadd.f32 %v1219, %v1361
      %v1479 = vadd.f32 %v1220, %v1366
      %v1480 = vadd.f32 %v1221, %v1366
      %v1481 = vadd.f32 %v1222, %v1371
      %v1482 = vadd.f32 %v1223, %v1371
      %v1483 = vadd.f32 %v1224, %v1376
      %v1484 = vadd.f32 %v1225, %v1376
      %v1485 = vadd.f32 %v1226, %v1381
      %v1486 = vadd.f32 %v1227, %v1381
      %v1487 = vadd.f32 %v1228, %v1386
      %v1488 = vadd.f32 %v1229, %v1386
      %v1489 = vadd.f32 %v1230, %v1391
      %v1490 = vadd.f32 %v1231, %v1391
      %v1491 = vadd.f32 %v1232, %v1396
      %v1492 = vadd.f32 %v1233, %v1396
      %v1493 = vadd.f32 %v1234, %v1401
      %v1494 = vadd.f32 %v1235, %v1401
      %v1495 = vadd.f32 %v1236, %v1406
      %v1496 = vadd.f32 %v1237, %v1406
      %v1497 = vadd.f32 %v1238, %v1411
      %v1498 = vadd.f32 %v1239, %v1411
      %v1499 = vadd.f32 %v1240, %v1416
      %v1500 = vadd.f32 %v1241, %v1416
      %v1501 = vadd.f32 %v1242, %v1421
      %v1502 = vadd.f32 %v1243, %v1421
      %v1503 = vadd.f32 %v1244, %v1426
      %v1504 = vadd.f32 %v1245, %v1426
      %v1505 = vadd.f32 %v1246, %v1431
      %v1506 = vadd.f32 %v1247, %v1431
      %v1507 = vmax.f32 %v1433, 0.0
      %v1508 = vmax.f32 %v1434, 0.0
      %v1509 = vmax.f32 %v1435, 0.0
      %v1510 = vmax.f32 %v1436, 0.0
      %v1511 = vmax.f32 %v1437, 0.0
      %v1512 = vmax.f32 %v1438, 0.0
      %v1513 = vmax.f32 %v1439, 0.0
      %v1514 = vmax.f32 %v1440, 0.0
      %v1515 = vmax.f32 %v1441, 0.0
      %v1516 = vmax.f32 %v1442, 0.0
      %v1517 = vmax.f32 %v1443, 0.0
      %v1518 = vmax.f32 %v1444, 0.0
      %v1519 = vmax.f32 %v1445, 0.0
      %v1520 = vmax.f32 %v1446, 0.0
      %v1521 = vmax.f32 %v1447, 0.0
      %v1522 = vmax.f32 %v1448, 0.0
      %v1523 = vmax.f32 %v1449, 0.0
      %v1524 = vmax.f32 %v1450, 0.0
      %v1525 = vmax.f32 %v1451, 0.0
      %v1526 = vmax.f32 %v1452, 0.0
      %v1527 = vmax.f32 %v1453, 0.0
      %v1528 = vmax.f32 %v1454, 0.0
      %v1529 = vmax.f32 %v1455, 0.0
      %v1530 = vmax.f32 %v1456, 0.0
      %v1531 = vmax.f32 %v1457, 0.0
      %v1532 = vmax.f32 %v1458, 0.0
      %v1533 = vmax.f32 %v1459, 0.0
      %v1534 = vmax.f32 %v1460, 0.0
      %v1535 = vmax.f32 %v1461, 0.0
      %v1536 = vmax.f32 %v1462, 0.0
      %v1537 = vmax.f32 %v1463, 0.0
      %v1538 = vmax.f32 %v1464, 0.0
      %v1539 = vmax.f32 %v1465, 0.0
      %v1540 = vmax.f32 %v1466, 0.0
      %v1541 = vmax.f32 %v1467, 0.0
      %v1542 = vmax.f32 %v1468, 0.0
      %v1543 = vmax.f32 %v1469, 0.0
      %v1544 = vmax.f32 %v1470, 0.0
      %v1545 = vmax.f32 %v1471, 0.0
      %v1546 = vmax.f32 %v1472, 0.0
      %v1547 = vmax.f32 %v1473, 0.0
      %v1548 = vmax.f32 %v1474, 0.0
      %v1549 = vmax.f32 %v1475, 0.0
      %v1550 = vmax.f32 %v1476, 0.0
      %v1551 = vmax.f32 %v1477, 0.0
      %v1552 = vmax.f32 %v1478, 0.0
      %v1553 = vmax.f32 %v1479, 0.0
      %v1554 = vmax.f32 %v1480, 0.0
      %v1555 = vmax.f32 %v1481, 0.0
      %v1556 = vmax.f32 %v1482, 0.0
      %v1557 = vmax.f32 %v1483, 0.0
      %v1558 = vmax.f32 %v1484, 0.0
      %v1559 = vmax.f32 %v1485, 0.0
      %v1560 = vmax.f32 %v1486, 0.0
      %v1561 = vmax.f32 %v1487, 0.0
      %v1562 = vmax.f32 %v1488, 0.0
      %v1563 = vmax.f32 %v1489, 0.0
      %v1564 = vmax.f32 %v1490, 0.0
      %v1565 = vmax.f32 %v1491, 0.0
      %v1566 = vmax.f32 %v1492, 0.0
      %v1567 = vmax.f32 %v1493, 0.0
      %v1568 = vmax.f32 %v1494, 0.0
      %v1569 = vmax.f32 %v1495, 0.0
      %v1570 = vmax.f32 %v1496, 0.0
      %v1571 = vmax.f32 %v1497, 0.0
      %v1572 = vmax.f32 %v1498, 0.0
      %v1573 = vmax.f32 %v1499, 0.0
      %v1574 = vmax.f32 %v1500, 0.0
      %v1575 = vmax.f32 %v1501, 0.0
      %v1576 = vmax.f32 %v1502, 0.0
      %v1577 = vmax.f32 %v1503, 0.0
      %v1578 = vmax.f32 %v1504, 0.0
      %v1579 = vmax.f32 %v1505, 0.0
      %v1580 = vmax.f32 %v1506, 0.0
      %1581 = vst [vmem:[%s172] sm:$0xff] %v1507
      %1582 = vst.msk [vmem:[%s172 + $0x8] sm:$0xff] %vm248, %v1508
      %1583 = vst [vmem:[%s172 + $0x10] sm:$0xff] %v1509
      %1584 = vst.msk [vmem:[%s172 + $0x18] sm:$0xff] %vm248, %v1510
      %1585 = vst [vmem:[%s172 + $0x20] sm:$0xff] %v1511
      %1586 = vst.msk [vmem:[%s172 + $0x28] sm:$0xff] %vm248, %v1512
      %1587 = vst [vmem:[%s172 + $0x30] sm:$0xff] %v1513
      %1588 = vst.msk [vmem:[%s172 + $0x38] sm:$0xff] %vm248, %v1514
      %1589 = vst [vmem:[%s172 + $0x40] sm:$0xff] %v1515
      %1590 = vst.msk [vmem:[%s172 + $0x48] sm:$0xff] %vm248, %v1516
      %1591 = vst [vmem:[%s172 + $0x50] sm:$0xff] %v1517
      %1592 = vst.msk [vmem:[%s172 + $0x58] sm:$0xff] %vm248, %v1518
      %1593 = vst [vmem:[%s172 + $0x60] sm:$0xff] %v1519
      %1594 = vst.msk [vmem:[%s172 + $0x68] sm:$0xff] %vm248, %v1520
      %1595 = vst [vmem:[%s172 + $0x70] sm:$0xff] %v1521
      %1596 = vst.msk [vmem:[%s172 + $0x78] sm:$0xff] %vm248, %v1522
      %1597 = vst [vmem:[%s172 + $0x80] sm:$0xff] %v1523
      %1598 = vst.msk [vmem:[%s172 + $0x88] sm:$0xff] %vm248, %v1524
      %1599 = vst [vmem:[%s172 + $0x90] sm:$0xff] %v1525
      %1600 = vst.msk [vmem:[%s172 + $0x98] sm:$0xff] %vm248, %v1526
      %1601 = vst [vmem:[%s172 + $0xa0] sm:$0xff] %v1527
      %1602 = vst.msk [vmem:[%s172 + $0xa8] sm:$0xff] %vm248, %v1528
      %1603 = vst [vmem:[%s172 + $0xb0] sm:$0xff] %v1529
      %1604 = vst.msk [vmem:[%s172 + $0xb8] sm:$0xff] %vm248, %v1530
      %1605 = vst [vmem:[%s172 + $0xc0] sm:$0xff] %v1531
      %1606 = vst.msk [vmem:[%s172 + $0xc8] sm:$0xff] %vm248, %v1532
      %1607 = vst [vmem:[%s172 + $0xd0] sm:$0xff] %v1533
      %1608 = vst.msk [vmem:[%s172 + $0xd8] sm:$0xff] %vm248, %v1534
      %1609 = vst [vmem:[%s172 + $0xe0] sm:$0xff] %v1535
      %1610 = vst.msk [vmem:[%s172 + $0xe8] sm:$0xff] %vm248, %v1536
      %1611 = vst [vmem:[%s172 + $0xf0] sm:$0xff] %v1537
      %1612 = vst.msk [vmem:[%s172 + $0xf8] sm:$0xff] %vm248, %v1538
      %1613 = vst [vmem:[%s172 + $0x100] sm:$0xff] %v1539
      %1614 = vst.msk [vmem:[%s172 + $0x108] sm:$0xff] %vm248, %v1540
      %1615 = vst [vmem:[%s172 + $0x110] sm:$0xff] %v1541
      %1616 = vst.msk [vmem:[%s172 + $0x118] sm:$0xff] %vm248, %v1542
      %1617 = vst [vmem:[%s172 + $0x120] sm:$0xff] %v1543
      %1618 = vst.msk [vmem:[%s172 + $0x128] sm:$0xff] %vm248, %v1544
      %1619 = vst [vmem:[%s172 + $0x130] sm:$0xff] %v1545
      %1620 = vst.msk [vmem:[%s172 + $0x138] sm:$0xff] %vm248, %v1546
      %1621 = vst [vmem:[%s172 + $0x140] sm:$0xff] %v1547
      %1622 = vst.msk [vmem:[%s172 + $0x148] sm:$0xff] %vm248, %v1548
      %1623 = vst [vmem:[%s172 + $0x150] sm:$0xff] %v1549
      %1624 = vst.msk [vmem:[%s172 + $0x158] sm:$0xff] %vm248, %v1550
      %1625 = vst [vmem:[%s172 + $0x160] sm:$0xff] %v1551
      %1626 = vst.msk [vmem:[%s172 + $0x168] sm:$0xff] %vm248, %v1552
      %1627 = vst [vmem:[%s172 + $0x170] sm:$0xff] %v1553
      %1628 = vst.msk [vmem:[%s172 + $0x178] sm:$0xff] %vm248, %v1554
      %1629 = vst [vmem:[%s172 + $0x180] sm:$0xff] %v1555
      %1630 = vst.msk [vmem:[%s172 + $0x188] sm:$0xff] %vm248, %v1556
      %1631 = vst [vmem:[%s172 + $0x190] sm:$0xff] %v1557
      %1632 = vst.msk [vmem:[%s172 + $0x198] sm:$0xff] %vm248, %v1558
      %1633 = vst [vmem:[%s172 + $0x1a0] sm:$0xff] %v1559
      %1634 = vst.msk [vmem:[%s172 + $0x1a8] sm:$0xff] %vm248, %v1560
      %1635 = vst [vmem:[%s172 + $0x1b0] sm:$0xff] %v1561
      %1636 = vst.msk [vmem:[%s172 + $0x1b8] sm:$0xff] %vm248, %v1562
      %1637 = vst [vmem:[%s172 + $0x1c0] sm:$0xff] %v1563
      %1638 = vst.msk [vmem:[%s172 + $0x1c8] sm:$0xff] %vm248, %v1564
      %1639 = vst [vmem:[%s172 + $0x1d0] sm:$0xff] %v1565
      %1640 = vst.msk [vmem:[%s172 + $0x1d8] sm:$0xff] %vm248, %v1566
      %1641 = vst [vmem:[%s172 + $0x1e0] sm:$0xff] %v1567
      %1642 = vst.msk [vmem:[%s172 + $0x1e8] sm:$0xff] %vm248, %v1568
      %1643 = vst [vmem:[%s172 + $0x1f0] sm:$0xff] %v1569
      %1644 = vst.msk [vmem:[%s172 + $0x1f8] sm:$0xff] %vm248, %v1570
      %1645 = vst [vmem:[%s172 + $0x200] sm:$0xff] %v1571
      %1646 = vst.msk [vmem:[%s172 + $0x208] sm:$0xff] %vm248, %v1572
      %1647 = vst [vmem:[%s172 + $0x210] sm:$0xff] %v1573
      %1648 = vst.msk [vmem:[%s172 + $0x218] sm:$0xff] %vm248, %v1574
      %1649 = vst [vmem:[%s172 + $0x220] sm:$0xff] %v1575
      %1650 = vst.msk [vmem:[%s172 + $0x228] sm:$0xff] %vm248, %v1576
      %1651 = vst [vmem:[%s172 + $0x230] sm:$0xff] %v1577
      %1652 = vst.msk [vmem:[%s172 + $0x238] sm:$0xff] %vm248, %v1578
      %1653 = vst [vmem:[%s172 + $0x240] sm:$0xff] %v1579
      %1654 = vst.msk [vmem:[%s172 + $0x248] sm:$0xff] %vm248, %v1580
      %s1655 = smul.u32 37, %s13
      %p1656 = scmp.lt.s32.totalorder %s1655, 110
      %s1657 = scalar_select %p1656, %s1655, 110
      %s1658 = smul.addr %s1657, 2
      %s1659 = smul.addr %s1658, 8
      %s1660 = scalar_lea.vmem %s2, %s1659
      // Predicated region
      $region29: #{_lambda_.1} parent=27 // pred_check
        %p1661 = pneg %p83
      $region30: #{_lambda_.1} parent=27 // pred_check_branch
        %1663 = sbr.rel (%p1661) target = $region32
      $region31: #{_lambda_.1} parent=27 // pred_region
        %s1664 = smul.u32 37, %s13
      $region32: #{_lambda_.1} parent=27 // pred_fallthru
        _
    $region28: #{_lambda_.1} parent=5 // pred_fallthru
      _
    %p1665 = scmp.le.s32.totalorder 2, %s8
    // Predicated region
    $region33: #{_lambda_.1} parent=5 // pred_check
      %p1666 = pneg %p1665
    $region34: #{_lambda_.1} parent=5 // pred_check_branch
      %1668 = sbr.rel (%p1666) target = $region36
    $region35: #{_lambda_.1} parent=5 // pred_region
      %s1669 = ssub.s32 %s8, 2
      // Predicated region
      $region37: #{_lambda_.1} parent=35 // pred_check
        %p1670 = pneg %p89
      $region38: #{_lambda_.1} parent=35 // pred_check_branch
        %1672 = sbr.rel (%p1670) target = $region40
      $region39: #{_lambda_.1} parent=35 // pred_region
        %s1673 = smul.u32 37, %s14
        %p1674 = scmp.lt.s32.totalorder %s1673, 110
        %s1675 = scalar_select %p1674, %s1673, 110
        %s1676 = smul.addr %s1675, 2
        %s1677 = smul.addr %s1676, 8
        %s1678 = scalar_lea.vmem %s2, %s1677
      $region40: #{_lambda_.1} parent=35 // pred_fallthru
        _
    $region36: #{_lambda_.1} parent=5 // pred_fallthru
      _
  $region6: #{_lambda_.1} parent=0 // loop_footer
    %s12 = sadd.s32 1, %s8
  $region7: #{_lambda_.1} parent=0 // loop_footer_branch
    %7 = sbr.rel target = $region3
  $region8: #{_lambda_.1} parent=0 // loop_exit
    _

</llo_original>
